<compile_context>
chip_gen: v5e
topology: v5e:2x2
jax: 0.10.0
libtpu: 0.0.40
codegen_flags: <defaults>
</compile_context>

<pallas_src>
import jax
import jax.numpy as jnp
from jax.experimental import pallas as pl
from jax.experimental.pallas import tpu as pltpu


def mul_conv1x1_kernel(scale_ref, x_ref, w_ref, o_ref):
    # scale_ref: (1, Cin)        f32  -- per-channel scale, lane-major
    # x_ref:     (Cin, HW)       f32  -- input pixels, channel-major
    # w_ref:     (Cout_blk, Cin) bf16 -- 1x1 conv weight rows for this block
    # o_ref:     (Cout_blk, HW)  f32
    #
    # Fold the channel scale into the weight rows (lane dims match -> cheap
    # sublane broadcast). Multiply in f32 (v5e VPU has no bf16 ALU), re-cast to
    # bf16 for the MXU, accumulate in f32.
    w_scaled = (w_ref[...].astype(jnp.float32) * scale_ref[...]).astype(jnp.bfloat16)
    o_ref[...] = jnp.dot(
        w_scaled,
        x_ref[...].astype(jnp.bfloat16),
        preferred_element_type=jnp.float32,
    ).astype(o_ref.dtype)


def prepare_conv_weight(weight_oihw):
    """One-time parameter prep (amortized): (Cout, Cin, 1, 1) f32 -> (Cout, Cin) bf16."""
    cout, cin = weight_oihw.shape[0], weight_oihw.shape[1]
    return weight_oihw.reshape(cout, cin).astype(jnp.bfloat16)


def mul_conv1x1(x_nchw, scale_nc11, w2d_bf16, *, cout_splits=1):
    """x_nchw: (1, Cin, H, W) f32, scale_nc11: (1, Cin, 1, 1) f32,
    w2d_bf16: (Cout, Cin) bf16 (pre-prepared)  ->  (1, Cout, H, W) f32."""
    n, cin, h, w = x_nchw.shape
    cout = w2d_bf16.shape[0]
    assert n == 1, "kernel written for batch 1 (matches module)"
    hw = h * w

    if cout_splits < 1 or cout % cout_splits != 0 or (cout // cout_splits) % 8 != 0:
        cout_splits = 1
    cout_blk = cout // cout_splits

    # All of these are free reshapes (no transposes, no HBM round trips).
    x2d = x_nchw.reshape(cin, hw)
    scale2d = scale_nc11.reshape(1, cin)  # lane-major: 6 KB, one contiguous DMA

    flops = 2 * cout * cin * hw
    bytes_accessed = (
        cin * hw * 4          # x (f32)
        + cin * 4             # scale (f32)
        + cout * cin * 2      # weight (bf16)
        + cout * hw * 4       # output (f32)
    )

    out2d = pl.pallas_call(
        mul_conv1x1_kernel,
        out_shape=jax.ShapeDtypeStruct((cout, hw), x_nchw.dtype),
        grid_spec=pltpu.PrefetchScalarGridSpec(
            num_scalar_prefetch=0,
            grid=(cout_splits,),
            in_specs=[
                pl.BlockSpec((1, cin), lambda i: (0, 0)),          # scale (replicated)
                pl.BlockSpec((cin, hw), lambda i: (0, 0)),         # x     (replicated)
                pl.BlockSpec((cout_blk, cin), lambda i: (i, 0)),   # weight rows
            ],
            out_specs=pl.BlockSpec((cout_blk, hw), lambda i: (i, 0)),
        ),
        compiler_params=pltpu.CompilerParams(
            dimension_semantics=("parallel",),  # lets v7x shard the Cout split over 2 TCs
        ),
        cost_estimate=pl.CostEstimate(
            flops=flops, transcendentals=0, bytes_accessed=bytes_accessed
        ),
    )(scale2d, x2d, w2d_bf16)

    # (Cout, HW) -> (1, Cout, H, W): free reshape.
    return out2d.reshape(1, cout, h, w)


def _cout_splits_for_device():
    """Split Cout across TensorCores only on v7x (2 TCs/chip).
    On single-TC chips (v5e/v6e) extra grid steps are pure overhead."""
    try:
        kind = jax.devices()[0].device_kind.lower()
    except Exception:
        return 1
    return 2 if ("v7" in kind or "7x" in kind) else 1


if __name__ == "__main__":
    key = jax.random.PRNGKey(0)
    k1, k2, k3 = jax.random.split(key, 3)

    # Shapes implied by the module's forward pass.
    N, CIN, H, W = 1, 1536, 7, 7
    COUT = 256

    x449 = jax.random.normal(k1, (N, CIN, H, W), dtype=jnp.float32)
    x454 = jax.random.normal(k2, (N, CIN, 1, 1), dtype=jnp.float32)
    # Deterministic conv weight (kaiming-like scale), bias=False.
    conv_w = jax.random.normal(k3, (COUT, CIN, 1, 1), dtype=jnp.float32) * (
        1.0 / jnp.sqrt(CIN)
    )

    w2d = prepare_conv_weight(conv_w)  # one-time, amortized in a real model
    splits = _cout_splits_for_device()
    out = mul_conv1x1(x449, x454, w2d, cout_splits=splits)
    out = jax.block_until_ready(out)
    assert out.shape == (N, COUT, H, W)

    # Reference 1: exact semantics of the kernel (scale folded into bf16 weight
    # rows in f32 then re-cast, bf16 x, f32 accumulation).
    w_q = conv_w.reshape(COUT, CIN).astype(jnp.bfloat16).astype(jnp.float32)
    ws_q = (w_q * x454.reshape(1, CIN)).astype(jnp.bfloat16).astype(jnp.float32)
    x_q = x449.reshape(CIN, H * W).astype(jnp.bfloat16).astype(jnp.float32)
    ref_q = jnp.einsum(
        "oc,cp->op", ws_q, x_q, precision=jax.lax.Precision.HIGHEST
    ).reshape(N, COUT, H, W)
    assert jnp.allclose(out, ref_q, atol=1e-3, rtol=1e-3)

    # Reference 2: full-f32 module semantics, loose tolerance for bf16 operands.
    ref_f32 = jnp.einsum(
        "nchw,oc->nohw",
        x449 * x454,
        conv_w.reshape(COUT, CIN),
        precision=jax.lax.Precision.HIGHEST,
    )
    assert jnp.allclose(out, ref_f32, atol=5e-2, rtol=5e-2)

    print("KERNEL_OK")
</pallas_src>

<mosaic_0001>
module attributes {stable_mosaic.version = 11 : i64} {
  func.func @mul_conv1x1_kernel(%arg0: i32, %arg1: memref<1x1536xf32, #tpu.memory_space<vmem>>, %arg2: memref<1536x49xf32, #tpu.memory_space<vmem>>, %arg3: memref<256x1536xbf16, #tpu.memory_space<vmem>>, %arg4: memref<256x49xf32, #tpu.memory_space<vmem>>) attributes {dimension_semantics = [#tpu.dimension_semantics<parallel>], iteration_bounds = array<i64: 1>, scalar_prefetch = 0 : i64, scratch_operands = 0 : i64, tpu.core_type = #tpu.core_type<tc>, window_params = [{pipeline_mode = #tpu.pipeline_mode<synchronous>, transform_indices = @transform_0, window_bounds = array<i64: 1, 1536>}, {pipeline_mode = #tpu.pipeline_mode<synchronous>, transform_indices = @transform_1, window_bounds = array<i64: 1536, 49>}, {transform_indices = @transform_2, window_bounds = array<i64: 256, 1536>}, {transform_indices = @transform_3, window_bounds = array<i64: 256, 49>}]} {
    %c0 = arith.constant 0 : index
    %c0_0 = arith.constant 0 : index
    %0 = vector.load %arg3[%c0, %c0_0] : memref<256x1536xbf16, #tpu.memory_space<vmem>>, vector<256x1536xbf16>
    %1 = arith.extf %0 : vector<256x1536xbf16> to vector<256x1536xf32>
    %c0_1 = arith.constant 0 : index
    %c0_2 = arith.constant 0 : index
    %2 = vector.load %arg1[%c0_1, %c0_2] : memref<1x1536xf32, #tpu.memory_space<vmem>>, vector<1x1536xf32>
    %3 = vector.broadcast %2 : vector<1x1536xf32> to vector<256x1536xf32>
    %4 = arith.mulf %1, %3 : vector<256x1536xf32>
    %5 = arith.truncf %4 : vector<256x1536xf32> to vector<256x1536xbf16>
    %c0_3 = arith.constant 0 : index
    %c0_4 = arith.constant 0 : index
    %6 = vector.load %arg2[%c0_3, %c0_4] : memref<1536x49xf32, #tpu.memory_space<vmem>>, vector<1536x49xf32>
    %7 = arith.truncf %6 : vector<1536x49xf32> to vector<1536x49xbf16>
    %cst = arith.constant dense<0.000000e+00> : vector<256x49xf32>
    %8 = tpu.matmul %5, %7, %cst {dimension_numbers = #tpu.dot_dimension_numbers<[1], [0], [0], [1], [0, 0, 1, 1], [], []>} : vector<256x1536xbf16>, vector<1536x49xbf16>, vector<256x49xf32> -> vector<256x49xf32>
    %c0_5 = arith.constant 0 : index
    %c0_6 = arith.constant 0 : index
    %9 = vector.load %arg4[%c0_5, %c0_6] : memref<256x49xf32, #tpu.memory_space<vmem>>, vector<256x49xf32>
    tpu.vector_store %arg4[%c0_5, %c0_6], %8 {strides = array<i32>} : memref<256x49xf32, #tpu.memory_space<vmem>>, vector<256x49xf32>,
    return
  }
  func.func @transform_0(%arg0: i32) -> (i32, i32) {
    %c0_i32 = arith.constant 0 : i32
    %c0_i32_0 = arith.constant 0 : i32
    %c0_i32_1 = arith.constant 0 : i32
    return %c0_i32, %c0_i32_0 : i32, i32
  }
  func.func @transform_1(%arg0: i32) -> (i32, i32) {
    %c0_i32 = arith.constant 0 : i32
    %c0_i32_0 = arith.constant 0 : i32
    %c0_i32_1 = arith.constant 0 : i32
    return %c0_i32, %c0_i32_0 : i32, i32
  }
  func.func @transform_2(%arg0: i32) -> (i32, i32) {
    %c0_i32 = arith.constant 0 : i32
    %c0_i32_0 = arith.constant 0 : i32
    return %arg0, %c0_i32 : i32, i32
  }
  func.func @transform_3(%arg0: i32) -> (i32, i32) {
    %c0_i32 = arith.constant 0 : i32
    %c0_i32_0 = arith.constant 0 : i32
    return %arg0, %c0_i32 : i32, i32
  }
}

</mosaic_0001>

<llo_original>
// kernel: tpu_custom_call.1
$region0: #{tpu_custom_call.1}
  #allocation0 [shape = 'u32[]', space=smem, size = 0x4, offset = 0x4, fixed_abs, tag = 'smem constant byte address 0x4 - core index']
  #allocation1 [shape = 'u32[72,128]{1,0:T(1,128)}', space=vmem, size = 0x9000, scoped, tag = 'internal scratch']
  %s0 = inlined_call_operand.vmem [shape: f32[1,1536], index: 0, kind: input, shape index: {}]
  %s1 = inlined_call_operand.vmem [shape: f32[1536,49], index: 1, kind: input, shape index: {}]
  %s2 = inlined_call_operand.vmem [shape: bf16[256,1536], index: 2, kind: input, shape index: {}]
  %s3 = inlined_call_operand.vmem [shape: f32[256,49], index: 3, kind: output, shape index: {}]
  %s4 = sld [smem:[#allocation0]]
  $region22: #{tpu_custom_call.1} parent=0
    _
  %s6 = ssub.s32 1, %s4
  %s7 = scalar_select 0, %s6, %s4
  // Predicated region
  $region2: #{tpu_custom_call.1} parent=0 // pred_check
    _
  $region3: #{tpu_custom_call.1} parent=0 // pred_check_branch
    %9 = sbr.rel (0) target = $region5
  $region4: #{tpu_custom_call.1} parent=0 // pred_region
    _
  $region5: #{tpu_custom_call.1} parent=0 // pred_fallthru
    _
  // Predicated region
  $region6: #{tpu_custom_call.1} parent=0 // pred_check
    _
  $region7: #{tpu_custom_call.1} parent=0 // pred_check_branch
    %11 = sbr.rel (0) target = $region9
  $region8: #{tpu_custom_call.1} parent=0 // pred_region
    _
  $region9: #{tpu_custom_call.1} parent=0 // pred_fallthru
    _
  // Predicated region
  $region10: #{tpu_custom_call.1} parent=0 // pred_check
    _
  $region11: #{tpu_custom_call.1} parent=0 // pred_check_branch
    %13 = sbr.rel (0) target = $region13
  $region12: #{tpu_custom_call.1} parent=0 // pred_region
    _
  $region13: #{tpu_custom_call.1} parent=0 // pred_fallthru
    _
  %v14 = vld [vmem:[%s2] sm:$0xff]
  %v15 = vld [vmem:[%s2 + $0x8] sm:$0xff]
  %v16 = vld [vmem:[%s2 + $0x10] sm:$0xff]
  %v17 = vld [vmem:[%s2 + $0x18] sm:$0xff]
  %v18 = vld [vmem:[%s2 + $0x20] sm:$0xff]
  %v19 = vld [vmem:[%s2 + $0x28] sm:$0xff]
  %v20 = vld [vmem:[%s2 + $0x30] sm:$0xff]
  %v21 = vld [vmem:[%s2 + $0x38] sm:$0xff]
  %v22 = vld [vmem:[%s2 + $0x40] sm:$0xff]
  %v23 = vld [vmem:[%s2 + $0x48] sm:$0xff]
  %v24 = vld [vmem:[%s2 + $0x50] sm:$0xff]
  %v25 = vld [vmem:[%s2 + $0x58] sm:$0xff]
  %v26 = vld [vmem:[%s2 + $0x60] sm:$0xff]
  %v27 = vld [vmem:[%s2 + $0x68] sm:$0xff]
  %v28 = vld [vmem:[%s2 + $0x70] sm:$0xff]
  %v29 = vld [vmem:[%s2 + $0x78] sm:$0xff]
  %v30 = vld [vmem:[%s2 + $0x80] sm:$0xff]
  %v31 = vld [vmem:[%s2 + $0x88] sm:$0xff]
  %v32 = vld [vmem:[%s2 + $0x90] sm:$0xff]
  %v33 = vld [vmem:[%s2 + $0x98] sm:$0xff]
  %v34 = vld [vmem:[%s2 + $0xa0] sm:$0xff]
  %v35 = vld [vmem:[%s2 + $0xa8] sm:$0xff]
  %v36 = vld [vmem:[%s2 + $0xb0] sm:$0xff]
  %v37 = vld [vmem:[%s2 + $0xb8] sm:$0xff]
  %v38 = vld [vmem:[%s2 + $0xc0] sm:$0xff]
  %v39 = vld [vmem:[%s2 + $0xc8] sm:$0xff]
  %v40 = vld [vmem:[%s2 + $0xd0] sm:$0xff]
  %v41 = vld [vmem:[%s2 + $0xd8] sm:$0xff]
  %v42 = vld [vmem:[%s2 + $0xe0] sm:$0xff]
  %v43 = vld [vmem:[%s2 + $0xe8] sm:$0xff]
  %v44 = vld [vmem:[%s2 + $0xf0] sm:$0xff]
  %v45 = vld [vmem:[%s2 + $0xf8] sm:$0xff]
  %v46 = vld [vmem:[%s2 + $0x100] sm:$0xff]
  %v47 = vld [vmem:[%s2 + $0x108] sm:$0xff]
  %v48 = vld [vmem:[%s2 + $0x110] sm:$0xff]
  %v49 = vld [vmem:[%s2 + $0x118] sm:$0xff]
  %v50 = vld [vmem:[%s2 + $0x120] sm:$0xff]
  %v51 = vld [vmem:[%s2 + $0x128] sm:$0xff]
  %v52 = vld [vmem:[%s2 + $0x130] sm:$0xff]
  %v53 = vld [vmem:[%s2 + $0x138] sm:$0xff]
  %v54 = vld [vmem:[%s2 + $0x140] sm:$0xff]
  %v55 = vld [vmem:[%s2 + $0x148] sm:$0xff]
  %v56 = vld [vmem:[%s2 + $0x150] sm:$0xff]
  %v57 = vld [vmem:[%s2 + $0x158] sm:$0xff]
  %v58 = vld [vmem:[%s2 + $0x160] sm:$0xff]
  %v59 = vld [vmem:[%s2 + $0x168] sm:$0xff]
  %v60 = vld [vmem:[%s2 + $0x170] sm:$0xff]
  %v61 = vld [vmem:[%s2 + $0x178] sm:$0xff]
  %v62 = vld [vmem:[%s2 + $0x180] sm:$0xff]
  %v63 = vld [vmem:[%s2 + $0x188] sm:$0xff]
  %v64 = vld [vmem:[%s2 + $0x190] sm:$0xff]
  %v65 = vld [vmem:[%s2 + $0x198] sm:$0xff]
  %v66 = vld [vmem:[%s2 + $0x1a0] sm:$0xff]
  %v67 = vld [vmem:[%s2 + $0x1a8] sm:$0xff]
  %v68 = vld [vmem:[%s2 + $0x1b0] sm:$0xff]
  %v69 = vld [vmem:[%s2 + $0x1b8] sm:$0xff]
  %v70 = vld [vmem:[%s2 + $0x1c0] sm:$0xff]
  %v71 = vld [vmem:[%s2 + $0x1c8] sm:$0xff]
  %v72 = vld [vmem:[%s2 + $0x1d0] sm:$0xff]
  %v73 = vld [vmem:[%s2 + $0x1d8] sm:$0xff]
  %v74 = vld [vmem:[%s2 + $0x1e0] sm:$0xff]
  %v75 = vld [vmem:[%s2 + $0x1e8] sm:$0xff]
  %v76 = vld [vmem:[%s2 + $0x1f0] sm:$0xff]
  %v77 = vld [vmem:[%s2 + $0x1f8] sm:$0xff]
  %v78 = vld [vmem:[%s2 + $0x200] sm:$0xff]
  %v79 = vld [vmem:[%s2 + $0x208] sm:$0xff]
  %v80 = vld [vmem:[%s2 + $0x210] sm:$0xff]
  %v81 = vld [vmem:[%s2 + $0x218] sm:$0xff]
  %v82 = vld [vmem:[%s2 + $0x220] sm:$0xff]
  %v83 = vld [vmem:[%s2 + $0x228] sm:$0xff]
  %v84 = vld [vmem:[%s2 + $0x230] sm:$0xff]
  %v85 = vld [vmem:[%s2 + $0x238] sm:$0xff]
  %v86 = vld [vmem:[%s2 + $0x240] sm:$0xff]
  %v87 = vld [vmem:[%s2 + $0x248] sm:$0xff]
  %v88 = vld [vmem:[%s2 + $0x250] sm:$0xff]
  %v89 = vld [vmem:[%s2 + $0x258] sm:$0xff]
  %v90 = vld [vmem:[%s2 + $0x260] sm:$0xff]
  %v91 = vld [vmem:[%s2 + $0x268] sm:$0xff]
  %v92 = vld [vmem:[%s2 + $0x270] sm:$0xff]
  %v93 = vld [vmem:[%s2 + $0x278] sm:$0xff]
  %v94 = vld [vmem:[%s2 + $0x280] sm:$0xff]
  %v95 = vld [vmem:[%s2 + $0x288] sm:$0xff]
  %v96 = vld [vmem:[%s2 + $0x290] sm:$0xff]
  %v97 = vld [vmem:[%s2 + $0x298] sm:$0xff]
  %v98 = vld [vmem:[%s2 + $0x2a0] sm:$0xff]
  %v99 = vld [vmem:[%s2 + $0x2a8] sm:$0xff]
  %v100 = vld [vmem:[%s2 + $0x2b0] sm:$0xff]
  %v101 = vld [vmem:[%s2 + $0x2b8] sm:$0xff]
  %v102 = vld [vmem:[%s2 + $0x2c0] sm:$0xff]
  %v103 = vld [vmem:[%s2 + $0x2c8] sm:$0xff]
  %v104 = vld [vmem:[%s2 + $0x2d0] sm:$0xff]
  %v105 = vld [vmem:[%s2 + $0x2d8] sm:$0xff]
  %v106 = vld [vmem:[%s2 + $0x2e0] sm:$0xff]
  %v107 = vld [vmem:[%s2 + $0x2e8] sm:$0xff]
  %v108 = vld [vmem:[%s2 + $0x2f0] sm:$0xff]
  %v109 = vld [vmem:[%s2 + $0x2f8] sm:$0xff]
  %v110 = vld [vmem:[%s2 + $0x300] sm:$0xff]
  %v111 = vld [vmem:[%s2 + $0x308] sm:$0xff]
  %v112 = vld [vmem:[%s2 + $0x310] sm:$0xff]
  %v113 = vld [vmem:[%s2 + $0x318] sm:$0xff]
  %v114 = vld [vmem:[%s2 + $0x320] sm:$0xff]
  %v115 = vld [vmem:[%s2 + $0x328] sm:$0xff]
  %v116 = vld [vmem:[%s2 + $0x330] sm:$0xff]
  %v117 = vld [vmem:[%s2 + $0x338] sm:$0xff]
  %v118 = vld [vmem:[%s2 + $0x340] sm:$0xff]
  %v119 = vld [vmem:[%s2 + $0x348] sm:$0xff]
  %v120 = vld [vmem:[%s2 + $0x350] sm:$0xff]
  %v121 = vld [vmem:[%s2 + $0x358] sm:$0xff]
  %v122 = vld [vmem:[%s2 + $0x360] sm:$0xff]
  %v123 = vld [vmem:[%s2 + $0x368] sm:$0xff]
  %v124 = vld [vmem:[%s2 + $0x370] sm:$0xff]
  %v125 = vld [vmem:[%s2 + $0x378] sm:$0xff]
  %v126 = vld [vmem:[%s2 + $0x380] sm:$0xff]
  %v127 = vld [vmem:[%s2 + $0x388] sm:$0xff]
  %v128 = vld [vmem:[%s2 + $0x390] sm:$0xff]
  %v129 = vld [vmem:[%s2 + $0x398] sm:$0xff]
  %v130 = vld [vmem:[%s2 + $0x3a0] sm:$0xff]
  %v131 = vld [vmem:[%s2 + $0x3a8] sm:$0xff]
  %v132 = vld [vmem:[%s2 + $0x3b0] sm:$0xff]
  %v133 = vld [vmem:[%s2 + $0x3b8] sm:$0xff]
  %v134 = vld [vmem:[%s2 + $0x3c0] sm:$0xff]
  %v135 = vld [vmem:[%s2 + $0x3c8] sm:$0xff]
  %v136 = vld [vmem:[%s2 + $0x3d0] sm:$0xff]
  %v137 = vld [vmem:[%s2 + $0x3d8] sm:$0xff]
  %v138 = vld [vmem:[%s2 + $0x3e0] sm:$0xff]
  %v139 = vld [vmem:[%s2 + $0x3e8] sm:$0xff]
  %v140 = vld [vmem:[%s2 + $0x3f0] sm:$0xff]
  %v141 = vld [vmem:[%s2 + $0x3f8] sm:$0xff]
  %v142 = vld [vmem:[%s2 + $0x400] sm:$0xff]
  %v143 = vld [vmem:[%s2 + $0x408] sm:$0xff]
  %v144 = vld [vmem:[%s2 + $0x410] sm:$0xff]
  %v145 = vld [vmem:[%s2 + $0x418] sm:$0xff]
  %v146 = vld [vmem:[%s2 + $0x420] sm:$0xff]
  %v147 = vld [vmem:[%s2 + $0x428] sm:$0xff]
  %v148 = vld [vmem:[%s2 + $0x430] sm:$0xff]
  %v149 = vld [vmem:[%s2 + $0x438] sm:$0xff]
  %v150 = vld [vmem:[%s2 + $0x440] sm:$0xff]
  %v151 = vld [vmem:[%s2 + $0x448] sm:$0xff]
  %v152 = vld [vmem:[%s2 + $0x450] sm:$0xff]
  %v153 = vld [vmem:[%s2 + $0x458] sm:$0xff]
  %v154 = vld [vmem:[%s2 + $0x460] sm:$0xff]
  %v155 = vld [vmem:[%s2 + $0x468] sm:$0xff]
  %v156 = vld [vmem:[%s2 + $0x470] sm:$0xff]
  %v157 = vld [vmem:[%s2 + $0x478] sm:$0xff]
  %v158 = vld [vmem:[%s2 + $0x480] sm:$0xff]
  %v159 = vld [vmem:[%s2 + $0x488] sm:$0xff]
  %v160 = vld [vmem:[%s2 + $0x490] sm:$0xff]
  %v161 = vld [vmem:[%s2 + $0x498] sm:$0xff]
  %v162 = vld [vmem:[%s2 + $0x4a0] sm:$0xff]
  %v163 = vld [vmem:[%s2 + $0x4a8] sm:$0xff]
  %v164 = vld [vmem:[%s2 + $0x4b0] sm:$0xff]
  %v165 = vld [vmem:[%s2 + $0x4b8] sm:$0xff]
  %v166 = vld [vmem:[%s2 + $0x4c0] sm:$0xff]
  %v167 = vld [vmem:[%s2 + $0x4c8] sm:$0xff]
  %v168 = vld [vmem:[%s2 + $0x4d0] sm:$0xff]
  %v169 = vld [vmem:[%s2 + $0x4d8] sm:$0xff]
  %v170 = vld [vmem:[%s2 + $0x4e0] sm:$0xff]
  %v171 = vld [vmem:[%s2 + $0x4e8] sm:$0xff]
  %v172 = vld [vmem:[%s2 + $0x4f0] sm:$0xff]
  %v173 = vld [vmem:[%s2 + $0x4f8] sm:$0xff]
  %v174 = vld [vmem:[%s2 + $0x500] sm:$0xff]
  %v175 = vld [vmem:[%s2 + $0x508] sm:$0xff]
  %v176 = vld [vmem:[%s2 + $0x510] sm:$0xff]
  %v177 = vld [vmem:[%s2 + $0x518] sm:$0xff]
  %v178 = vld [vmem:[%s2 + $0x520] sm:$0xff]
  %v179 = vld [vmem:[%s2 + $0x528] sm:$0xff]
  %v180 = vld [vmem:[%s2 + $0x530] sm:$0xff]
  %v181 = vld [vmem:[%s2 + $0x538] sm:$0xff]
  %v182 = vld [vmem:[%s2 + $0x540] sm:$0xff]
  %v183 = vld [vmem:[%s2 + $0x548] sm:$0xff]
  %v184 = vld [vmem:[%s2 + $0x550] sm:$0xff]
  %v185 = vld [vmem:[%s2 + $0x558] sm:$0xff]
  %v186 = vld [vmem:[%s2 + $0x560] sm:$0xff]
  %v187 = vld [vmem:[%s2 + $0x568] sm:$0xff]
  %v188 = vld [vmem:[%s2 + $0x570] sm:$0xff]
  %v189 = vld [vmem:[%s2 + $0x578] sm:$0xff]
  %v190 = vld [vmem:[%s2 + $0x580] sm:$0xff]
  %v191 = vld [vmem:[%s2 + $0x588] sm:$0xff]
  %v192 = vld [vmem:[%s2 + $0x590] sm:$0xff]
  %v193 = vld [vmem:[%s2 + $0x598] sm:$0xff]
  %v194 = vld [vmem:[%s2 + $0x5a0] sm:$0xff]
  %v195 = vld [vmem:[%s2 + $0x5a8] sm:$0xff]
  %v196 = vld [vmem:[%s2 + $0x5b0] sm:$0xff]
  %v197 = vld [vmem:[%s2 + $0x5b8] sm:$0xff]
  %v198 = vld [vmem:[%s2 + $0x5c0] sm:$0xff]
  %v199 = vld [vmem:[%s2 + $0x5c8] sm:$0xff]
  %v200 = vld [vmem:[%s2 + $0x5d0] sm:$0xff]
  %v201 = vld [vmem:[%s2 + $0x5d8] sm:$0xff]
  %v202 = vld [vmem:[%s2 + $0x5e0] sm:$0xff]
  %v203 = vld [vmem:[%s2 + $0x5e8] sm:$0xff]
  %v204 = vld [vmem:[%s2 + $0x5f0] sm:$0xff]
  %v205 = vld [vmem:[%s2 + $0x5f8] sm:$0xff]
  %v206 = vunpack.c.l.bf16 %v14
  %v207 = vunpack.c.h.bf16 %v14
  %v208 = vunpack.c.l.bf16 %v15
  %v209 = vunpack.c.h.bf16 %v15
  %v210 = vunpack.c.l.bf16 %v16
  %v211 = vunpack.c.h.bf16 %v16
  %v212 = vunpack.c.l.bf16 %v17
  %v213 = vunpack.c.h.bf16 %v17
  %v214 = vunpack.c.l.bf16 %v18
  %v215 = vunpack.c.h.bf16 %v18
  %v216 = vunpack.c.l.bf16 %v19
  %v217 = vunpack.c.h.bf16 %v19
  %v218 = vunpack.c.l.bf16 %v20
  %v219 = vunpack.c.h.bf16 %v20
  %v220 = vunpack.c.l.bf16 %v21
  %v221 = vunpack.c.h.bf16 %v21
  %v222 = vunpack.c.l.bf16 %v22
  %v223 = vunpack.c.h.bf16 %v22
  %v224 = vunpack.c.l.bf16 %v23
  %v225 = vunpack.c.h.bf16 %v23
  %v226 = vunpack.c.l.bf16 %v24
  %v227 = vunpack.c.h.bf16 %v24
  %v228 = vunpack.c.l.bf16 %v25
  %v229 = vunpack.c.h.bf16 %v25
  %v230 = vunpack.c.l.bf16 %v26
  %v231 = vunpack.c.h.bf16 %v26
  %v232 = vunpack.c.l.bf16 %v27
  %v233 = vunpack.c.h.bf16 %v27
  %v234 = vunpack.c.l.bf16 %v28
  %v235 = vunpack.c.h.bf16 %v28
  %v236 = vunpack.c.l.bf16 %v29
  %v237 = vunpack.c.h.bf16 %v29
  %v238 = vunpack.c.l.bf16 %v30
  %v239 = vunpack.c.h.bf16 %v30
  %v240 = vunpack.c.l.bf16 %v31
  %v241 = vunpack.c.h.bf16 %v31
  %v242 = vunpack.c.l.bf16 %v32
  %v243 = vunpack.c.h.bf16 %v32
  %v244 = vunpack.c.l.bf16 %v33
  %v245 = vunpack.c.h.bf16 %v33
  %v246 = vunpack.c.l.bf16 %v34
  %v247 = vunpack.c.h.bf16 %v34
  %v248 = vunpack.c.l.bf16 %v35
  %v249 = vunpack.c.h.bf16 %v35
  %v250 = vunpack.c.l.bf16 %v36
  %v251 = vunpack.c.h.bf16 %v36
  %v252 = vunpack.c.l.bf16 %v37
  %v253 = vunpack.c.h.bf16 %v37
  %v254 = vunpack.c.l.bf16 %v38
  %v255 = vunpack.c.h.bf16 %v38
  %v256 = vunpack.c.l.bf16 %v39
  %v257 = vunpack.c.h.bf16 %v39
  %v258 = vunpack.c.l.bf16 %v40
  %v259 = vunpack.c.h.bf16 %v40
  %v260 = vunpack.c.l.bf16 %v41
  %v261 = vunpack.c.h.bf16 %v41
  %v262 = vunpack.c.l.bf16 %v42
  %v263 = vunpack.c.h.bf16 %v42
  %v264 = vunpack.c.l.bf16 %v43
  %v265 = vunpack.c.h.bf16 %v43
  %v266 = vunpack.c.l.bf16 %v44
  %v267 = vunpack.c.h.bf16 %v44
  %v268 = vunpack.c.l.bf16 %v45
  %v269 = vunpack.c.h.bf16 %v45
  %v270 = vunpack.c.l.bf16 %v46
  %v271 = vunpack.c.h.bf16 %v46
  %v272 = vunpack.c.l.bf16 %v47
  %v273 = vunpack.c.h.bf16 %v47
  %v274 = vunpack.c.l.bf16 %v48
  %v275 = vunpack.c.h.bf16 %v48
  %v276 = vunpack.c.l.bf16 %v49
  %v277 = vunpack.c.h.bf16 %v49
  %v278 = vunpack.c.l.bf16 %v50
  %v279 = vunpack.c.h.bf16 %v50
  %v280 = vunpack.c.l.bf16 %v51
  %v281 = vunpack.c.h.bf16 %v51
  %v282 = vunpack.c.l.bf16 %v52
  %v283 = vunpack.c.h.bf16 %v52
  %v284 = vunpack.c.l.bf16 %v53
  %v285 = vunpack.c.h.bf16 %v53
  %v286 = vunpack.c.l.bf16 %v54
  %v287 = vunpack.c.h.bf16 %v54
  %v288 = vunpack.c.l.bf16 %v55
  %v289 = vunpack.c.h.bf16 %v55
  %v290 = vunpack.c.l.bf16 %v56
  %v291 = vunpack.c.h.bf16 %v56
  %v292 = vunpack.c.l.bf16 %v57
  %v293 = vunpack.c.h.bf16 %v57
  %v294 = vunpack.c.l.bf16 %v58
  %v295 = vunpack.c.h.bf16 %v58
  %v296 = vunpack.c.l.bf16 %v59
  %v297 = vunpack.c.h.bf16 %v59
  %v298 = vunpack.c.l.bf16 %v60
  %v299 = vunpack.c.h.bf16 %v60
  %v300 = vunpack.c.l.bf16 %v61
  %v301 = vunpack.c.h.bf16 %v61
  %v302 = vunpack.c.l.bf16 %v62
  %v303 = vunpack.c.h.bf16 %v62
  %v304 = vunpack.c.l.bf16 %v63
  %v305 = vunpack.c.h.bf16 %v63
  %v306 = vunpack.c.l.bf16 %v64
  %v307 = vunpack.c.h.bf16 %v64
  %v308 = vunpack.c.l.bf16 %v65
  %v309 = vunpack.c.h.bf16 %v65
  %v310 = vunpack.c.l.bf16 %v66
  %v311 = vunpack.c.h.bf16 %v66
  %v312 = vunpack.c.l.bf16 %v67
  %v313 = vunpack.c.h.bf16 %v67
  %v314 = vunpack.c.l.bf16 %v68
  %v315 = vunpack.c.h.bf16 %v68
  %v316 = vunpack.c.l.bf16 %v69
  %v317 = vunpack.c.h.bf16 %v69
  %v318 = vunpack.c.l.bf16 %v70
  %v319 = vunpack.c.h.bf16 %v70
  %v320 = vunpack.c.l.bf16 %v71
  %v321 = vunpack.c.h.bf16 %v71
  %v322 = vunpack.c.l.bf16 %v72
  %v323 = vunpack.c.h.bf16 %v72
  %v324 = vunpack.c.l.bf16 %v73
  %v325 = vunpack.c.h.bf16 %v73
  %v326 = vunpack.c.l.bf16 %v74
  %v327 = vunpack.c.h.bf16 %v74
  %v328 = vunpack.c.l.bf16 %v75
  %v329 = vunpack.c.h.bf16 %v75
  %v330 = vunpack.c.l.bf16 %v76
  %v331 = vunpack.c.h.bf16 %v76
  %v332 = vunpack.c.l.bf16 %v77
  %v333 = vunpack.c.h.bf16 %v77
  %v334 = vunpack.c.l.bf16 %v78
  %v335 = vunpack.c.h.bf16 %v78
  %v336 = vunpack.c.l.bf16 %v79
  %v337 = vunpack.c.h.bf16 %v79
  %v338 = vunpack.c.l.bf16 %v80
  %v339 = vunpack.c.h.bf16 %v80
  %v340 = vunpack.c.l.bf16 %v81
  %v341 = vunpack.c.h.bf16 %v81
  %v342 = vunpack.c.l.bf16 %v82
  %v343 = vunpack.c.h.bf16 %v82
  %v344 = vunpack.c.l.bf16 %v83
  %v345 = vunpack.c.h.bf16 %v83
  %v346 = vunpack.c.l.bf16 %v84
  %v347 = vunpack.c.h.bf16 %v84
  %v348 = vunpack.c.l.bf16 %v85
  %v349 = vunpack.c.h.bf16 %v85
  %v350 = vunpack.c.l.bf16 %v86
  %v351 = vunpack.c.h.bf16 %v86
  %v352 = vunpack.c.l.bf16 %v87
  %v353 = vunpack.c.h.bf16 %v87
  %v354 = vunpack.c.l.bf16 %v88
  %v355 = vunpack.c.h.bf16 %v88
  %v356 = vunpack.c.l.bf16 %v89
  %v357 = vunpack.c.h.bf16 %v89
  %v358 = vunpack.c.l.bf16 %v90
  %v359 = vunpack.c.h.bf16 %v90
  %v360 = vunpack.c.l.bf16 %v91
  %v361 = vunpack.c.h.bf16 %v91
  %v362 = vunpack.c.l.bf16 %v92
  %v363 = vunpack.c.h.bf16 %v92
  %v364 = vunpack.c.l.bf16 %v93
  %v365 = vunpack.c.h.bf16 %v93
  %v366 = vunpack.c.l.bf16 %v94
  %v367 = vunpack.c.h.bf16 %v94
  %v368 = vunpack.c.l.bf16 %v95
  %v369 = vunpack.c.h.bf16 %v95
  %v370 = vunpack.c.l.bf16 %v96
  %v371 = vunpack.c.h.bf16 %v96
  %v372 = vunpack.c.l.bf16 %v97
  %v373 = vunpack.c.h.bf16 %v97
  %v374 = vunpack.c.l.bf16 %v98
  %v375 = vunpack.c.h.bf16 %v98
  %v376 = vunpack.c.l.bf16 %v99
  %v377 = vunpack.c.h.bf16 %v99
  %v378 = vunpack.c.l.bf16 %v100
  %v379 = vunpack.c.h.bf16 %v100
  %v380 = vunpack.c.l.bf16 %v101
  %v381 = vunpack.c.h.bf16 %v101
  %v382 = vunpack.c.l.bf16 %v102
  %v383 = vunpack.c.h.bf16 %v102
  %v384 = vunpack.c.l.bf16 %v103
  %v385 = vunpack.c.h.bf16 %v103
  %v386 = vunpack.c.l.bf16 %v104
  %v387 = vunpack.c.h.bf16 %v104
  %v388 = vunpack.c.l.bf16 %v105
  %v389 = vunpack.c.h.bf16 %v105
  %v390 = vunpack.c.l.bf16 %v106
  %v391 = vunpack.c.h.bf16 %v106
  %v392 = vunpack.c.l.bf16 %v107
  %v393 = vunpack.c.h.bf16 %v107
  %v394 = vunpack.c.l.bf16 %v108
  %v395 = vunpack.c.h.bf16 %v108
  %v396 = vunpack.c.l.bf16 %v109
  %v397 = vunpack.c.h.bf16 %v109
  %v398 = vunpack.c.l.bf16 %v110
  %v399 = vunpack.c.h.bf16 %v110
  %v400 = vunpack.c.l.bf16 %v111
  %v401 = vunpack.c.h.bf16 %v111
  %v402 = vunpack.c.l.bf16 %v112
  %v403 = vunpack.c.h.bf16 %v112
  %v404 = vunpack.c.l.bf16 %v113
  %v405 = vunpack.c.h.bf16 %v113
  %v406 = vunpack.c.l.bf16 %v114
  %v407 = vunpack.c.h.bf16 %v114
  %v408 = vunpack.c.l.bf16 %v115
  %v409 = vunpack.c.h.bf16 %v115
  %v410 = vunpack.c.l.bf16 %v116
  %v411 = vunpack.c.h.bf16 %v116
  %v412 = vunpack.c.l.bf16 %v117
  %v413 = vunpack.c.h.bf16 %v117
  %v414 = vunpack.c.l.bf16 %v118
  %v415 = vunpack.c.h.bf16 %v118
  %v416 = vunpack.c.l.bf16 %v119
  %v417 = vunpack.c.h.bf16 %v119
  %v418 = vunpack.c.l.bf16 %v120
  %v419 = vunpack.c.h.bf16 %v120
  %v420 = vunpack.c.l.bf16 %v121
  %v421 = vunpack.c.h.bf16 %v121
  %v422 = vunpack.c.l.bf16 %v122
  %v423 = vunpack.c.h.bf16 %v122
  %v424 = vunpack.c.l.bf16 %v123
  %v425 = vunpack.c.h.bf16 %v123
  %v426 = vunpack.c.l.bf16 %v124
  %v427 = vunpack.c.h.bf16 %v124
  %v428 = vunpack.c.l.bf16 %v125
  %v429 = vunpack.c.h.bf16 %v125
  %v430 = vunpack.c.l.bf16 %v126
  %v431 = vunpack.c.h.bf16 %v126
  %v432 = vunpack.c.l.bf16 %v127
  %v433 = vunpack.c.h.bf16 %v127
  %v434 = vunpack.c.l.bf16 %v128
  %v435 = vunpack.c.h.bf16 %v128
  %v436 = vunpack.c.l.bf16 %v129
  %v437 = vunpack.c.h.bf16 %v129
  %v438 = vunpack.c.l.bf16 %v130
  %v439 = vunpack.c.h.bf16 %v130
  %v440 = vunpack.c.l.bf16 %v131
  %v441 = vunpack.c.h.bf16 %v131
  %v442 = vunpack.c.l.bf16 %v132
  %v443 = vunpack.c.h.bf16 %v132
  %v444 = vunpack.c.l.bf16 %v133
  %v445 = vunpack.c.h.bf16 %v133
  %v446 = vunpack.c.l.bf16 %v134
  %v447 = vunpack.c.h.bf16 %v134
  %v448 = vunpack.c.l.bf16 %v135
  %v449 = vunpack.c.h.bf16 %v135
  %v450 = vunpack.c.l.bf16 %v136
  %v451 = vunpack.c.h.bf16 %v136
  %v452 = vunpack.c.l.bf16 %v137
  %v453 = vunpack.c.h.bf16 %v137
  %v454 = vunpack.c.l.bf16 %v138
  %v455 = vunpack.c.h.bf16 %v138
  %v456 = vunpack.c.l.bf16 %v139
  %v457 = vunpack.c.h.bf16 %v139
  %v458 = vunpack.c.l.bf16 %v140
  %v459 = vunpack.c.h.bf16 %v140
  %v460 = vunpack.c.l.bf16 %v141
  %v461 = vunpack.c.h.bf16 %v141
  %v462 = vunpack.c.l.bf16 %v142
  %v463 = vunpack.c.h.bf16 %v142
  %v464 = vunpack.c.l.bf16 %v143
  %v465 = vunpack.c.h.bf16 %v143
  %v466 = vunpack.c.l.bf16 %v144
  %v467 = vunpack.c.h.bf16 %v144
  %v468 = vunpack.c.l.bf16 %v145
  %v469 = vunpack.c.h.bf16 %v145
  %v470 = vunpack.c.l.bf16 %v146
  %v471 = vunpack.c.h.bf16 %v146
  %v472 = vunpack.c.l.bf16 %v147
  %v473 = vunpack.c.h.bf16 %v147
  %v474 = vunpack.c.l.bf16 %v148
  %v475 = vunpack.c.h.bf16 %v148
  %v476 = vunpack.c.l.bf16 %v149
  %v477 = vunpack.c.h.bf16 %v149
  %v478 = vunpack.c.l.bf16 %v150
  %v479 = vunpack.c.h.bf16 %v150
  %v480 = vunpack.c.l.bf16 %v151
  %v481 = vunpack.c.h.bf16 %v151
  %v482 = vunpack.c.l.bf16 %v152
  %v483 = vunpack.c.h.bf16 %v152
  %v484 = vunpack.c.l.bf16 %v153
  %v485 = vunpack.c.h.bf16 %v153
  %v486 = vunpack.c.l.bf16 %v154
  %v487 = vunpack.c.h.bf16 %v154
  %v488 = vunpack.c.l.bf16 %v155
  %v489 = vunpack.c.h.bf16 %v155
  %v490 = vunpack.c.l.bf16 %v156
  %v491 = vunpack.c.h.bf16 %v156
  %v492 = vunpack.c.l.bf16 %v157
  %v493 = vunpack.c.h.bf16 %v157
  %v494 = vunpack.c.l.bf16 %v158
  %v495 = vunpack.c.h.bf16 %v158
  %v496 = vunpack.c.l.bf16 %v159
  %v497 = vunpack.c.h.bf16 %v159
  %v498 = vunpack.c.l.bf16 %v160
  %v499 = vunpack.c.h.bf16 %v160
  %v500 = vunpack.c.l.bf16 %v161
  %v501 = vunpack.c.h.bf16 %v161
  %v502 = vunpack.c.l.bf16 %v162
  %v503 = vunpack.c.h.bf16 %v162
  %v504 = vunpack.c.l.bf16 %v163
  %v505 = vunpack.c.h.bf16 %v163
  %v506 = vunpack.c.l.bf16 %v164
  %v507 = vunpack.c.h.bf16 %v164
  %v508 = vunpack.c.l.bf16 %v165
  %v509 = vunpack.c.h.bf16 %v165
  %v510 = vunpack.c.l.bf16 %v166
  %v511 = vunpack.c.h.bf16 %v166
  %v512 = vunpack.c.l.bf16 %v167
  %v513 = vunpack.c.h.bf16 %v167
  %v514 = vunpack.c.l.bf16 %v168
  %v515 = vunpack.c.h.bf16 %v168
  %v516 = vunpack.c.l.bf16 %v169
  %v517 = vunpack.c.h.bf16 %v169
  %v518 = vunpack.c.l.bf16 %v170
  %v519 = vunpack.c.h.bf16 %v170
  %v520 = vunpack.c.l.bf16 %v171
  %v521 = vunpack.c.h.bf16 %v171
  %v522 = vunpack.c.l.bf16 %v172
  %v523 = vunpack.c.h.bf16 %v172
  %v524 = vunpack.c.l.bf16 %v173
  %v525 = vunpack.c.h.bf16 %v173
  %v526 = vunpack.c.l.bf16 %v174
  %v527 = vunpack.c.h.bf16 %v174
  %v528 = vunpack.c.l.bf16 %v175
  %v529 = vunpack.c.h.bf16 %v175
  %v530 = vunpack.c.l.bf16 %v176
  %v531 = vunpack.c.h.bf16 %v176
  %v532 = vunpack.c.l.bf16 %v177
  %v533 = vunpack.c.h.bf16 %v177
  %v534 = vunpack.c.l.bf16 %v178
  %v535 = vunpack.c.h.bf16 %v178
  %v536 = vunpack.c.l.bf16 %v179
  %v537 = vunpack.c.h.bf16 %v179
  %v538 = vunpack.c.l.bf16 %v180
  %v539 = vunpack.c.h.bf16 %v180
  %v540 = vunpack.c.l.bf16 %v181
  %v541 = vunpack.c.h.bf16 %v181
  %v542 = vunpack.c.l.bf16 %v182
  %v543 = vunpack.c.h.bf16 %v182
  %v544 = vunpack.c.l.bf16 %v183
  %v545 = vunpack.c.h.bf16 %v183
  %v546 = vunpack.c.l.bf16 %v184
  %v547 = vunpack.c.h.bf16 %v184
  %v548 = vunpack.c.l.bf16 %v185
  %v549 = vunpack.c.h.bf16 %v185
  %v550 = vunpack.c.l.bf16 %v186
  %v551 = vunpack.c.h.bf16 %v186
  %v552 = vunpack.c.l.bf16 %v187
  %v553 = vunpack.c.h.bf16 %v187
  %v554 = vunpack.c.l.bf16 %v188
  %v555 = vunpack.c.h.bf16 %v188
  %v556 = vunpack.c.l.bf16 %v189
  %v557 = vunpack.c.h.bf16 %v189
  %v558 = vunpack.c.l.bf16 %v190
  %v559 = vunpack.c.h.bf16 %v190
  %v560 = vunpack.c.l.bf16 %v191
  %v561 = vunpack.c.h.bf16 %v191
  %v562 = vunpack.c.l.bf16 %v192
  %v563 = vunpack.c.h.bf16 %v192
  %v564 = vunpack.c.l.bf16 %v193
  %v565 = vunpack.c.h.bf16 %v193
  %v566 = vunpack.c.l.bf16 %v194
  %v567 = vunpack.c.h.bf16 %v194
  %v568 = vunpack.c.l.bf16 %v195
  %v569 = vunpack.c.h.bf16 %v195
  %v570 = vunpack.c.l.bf16 %v196
  %v571 = vunpack.c.h.bf16 %v196
  %v572 = vunpack.c.l.bf16 %v197
  %v573 = vunpack.c.h.bf16 %v197
  %v574 = vunpack.c.l.bf16 %v198
  %v575 = vunpack.c.h.bf16 %v198
  %v576 = vunpack.c.l.bf16 %v199
  %v577 = vunpack.c.h.bf16 %v199
  %v578 = vunpack.c.l.bf16 %v200
  %v579 = vunpack.c.h.bf16 %v200
  %v580 = vunpack.c.l.bf16 %v201
  %v581 = vunpack.c.h.bf16 %v201
  %v582 = vunpack.c.l.bf16 %v202
  %v583 = vunpack.c.h.bf16 %v202
  %v584 = vunpack.c.l.bf16 %v203
  %v585 = vunpack.c.h.bf16 %v203
  %v586 = vunpack.c.l.bf16 %v204
  %v587 = vunpack.c.h.bf16 %v204
  %v588 = vunpack.c.l.bf16 %v205
  %v589 = vunpack.c.h.bf16 %v205
  %v590 = vld [vmem:[%s0] sm:$0xff]
  %v591 = vld [vmem:[%s0 + $0x8] sm:$0xf]
  %v594 = vperm.slane %v590, 0
  %v595 = vperm.slane %v590, 1
  %v596 = vperm.slane %v590, 2
  %v597 = vperm.slane %v590, 3
  %v598 = vperm.slane %v590, 4
  %v599 = vperm.slane %v590, 5
  %v600 = vperm.slane %v590, 6
  %v601 = vperm.slane %v590, 7
  %v602 = vperm.slane %v591, 0
  %v603 = vperm.slane %v591, 1
  %v604 = vperm.slane %v591, 2
  %v605 = vperm.slane %v591, 3
  %v618 = vmul.f32 %v206, %v594
  %v619 = vmul.f32 %v207, %v595
  %v620 = vmul.f32 %v208, %v596
  %v621 = vmul.f32 %v209, %v597
  %v622 = vmul.f32 %v210, %v598
  %v623 = vmul.f32 %v211, %v599
  %v624 = vmul.f32 %v212, %v600
  %v625 = vmul.f32 %v213, %v601
  %v626 = vmul.f32 %v214, %v602
  %v627 = vmul.f32 %v215, %v603
  %v628 = vmul.f32 %v216, %v604
  %v629 = vmul.f32 %v217, %v605
  %v630 = vmul.f32 %v218, %v594
  %v631 = vmul.f32 %v219, %v595
  %v632 = vmul.f32 %v220, %v596
  %v633 = vmul.f32 %v221, %v597
  %v634 = vmul.f32 %v222, %v598
  %v635 = vmul.f32 %v223, %v599
  %v636 = vmul.f32 %v224, %v600
  %v637 = vmul.f32 %v225, %v601
  %v638 = vmul.f32 %v226, %v602
  %v639 = vmul.f32 %v227, %v603
  %v640 = vmul.f32 %v228, %v604
  %v641 = vmul.f32 %v229, %v605
  %v642 = vmul.f32 %v230, %v594
  %v643 = vmul.f32 %v231, %v595
  %v644 = vmul.f32 %v232, %v596
  %v645 = vmul.f32 %v233, %v597
  %v646 = vmul.f32 %v234, %v598
  %v647 = vmul.f32 %v235, %v599
  %v648 = vmul.f32 %v236, %v600
  %v649 = vmul.f32 %v237, %v601
  %v650 = vmul.f32 %v238, %v602
  %v651 = vmul.f32 %v239, %v603
  %v652 = vmul.f32 %v240, %v604
  %v653 = vmul.f32 %v241, %v605
  %v654 = vmul.f32 %v242, %v594
  %v655 = vmul.f32 %v243, %v595
  %v656 = vmul.f32 %v244, %v596
  %v657 = vmul.f32 %v245, %v597
  %v658 = vmul.f32 %v246, %v598
  %v659 = vmul.f32 %v247, %v599
  %v660 = vmul.f32 %v248, %v600
  %v661 = vmul.f32 %v249, %v601
  %v662 = vmul.f32 %v250, %v602
  %v663 = vmul.f32 %v251, %v603
  %v664 = vmul.f32 %v252, %v604
  %v665 = vmul.f32 %v253, %v605
  %v666 = vmul.f32 %v254, %v594
  %v667 = vmul.f32 %v255, %v595
  %v668 = vmul.f32 %v256, %v596
  %v669 = vmul.f32 %v257, %v597
  %v670 = vmul.f32 %v258, %v598
  %v671 = vmul.f32 %v259, %v599
  %v672 = vmul.f32 %v260, %v600
  %v673 = vmul.f32 %v261, %v601
  %v674 = vmul.f32 %v262, %v602
  %v675 = vmul.f32 %v263, %v603
  %v676 = vmul.f32 %v264, %v604
  %v677 = vmul.f32 %v265, %v605
  %v678 = vmul.f32 %v266, %v594
  %v679 = vmul.f32 %v267, %v595
  %v680 = vmul.f32 %v268, %v596
  %v681 = vmul.f32 %v269, %v597
  %v682 = vmul.f32 %v270, %v598
  %v683 = vmul.f32 %v271, %v599
  %v684 = vmul.f32 %v272, %v600
  %v685 = vmul.f32 %v273, %v601
  %v686 = vmul.f32 %v274, %v602
  %v687 = vmul.f32 %v275, %v603
  %v688 = vmul.f32 %v276, %v604
  %v689 = vmul.f32 %v277, %v605
  %v690 = vmul.f32 %v278, %v594
  %v691 = vmul.f32 %v279, %v595
  %v692 = vmul.f32 %v280, %v596
  %v693 = vmul.f32 %v281, %v597
  %v694 = vmul.f32 %v282, %v598
  %v695 = vmul.f32 %v283, %v599
  %v696 = vmul.f32 %v284, %v600
  %v697 = vmul.f32 %v285, %v601
  %v698 = vmul.f32 %v286, %v602
  %v699 = vmul.f32 %v287, %v603
  %v700 = vmul.f32 %v288, %v604
  %v701 = vmul.f32 %v289, %v605
  %v702 = vmul.f32 %v290, %v594
  %v703 = vmul.f32 %v291, %v595
  %v704 = vmul.f32 %v292, %v596
  %v705 = vmul.f32 %v293, %v597
  %v706 = vmul.f32 %v294, %v598
  %v707 = vmul.f32 %v295, %v599
  %v708 = vmul.f32 %v296, %v600
  %v709 = vmul.f32 %v297, %v601
  %v710 = vmul.f32 %v298, %v602
  %v711 = vmul.f32 %v299, %v603
  %v712 = vmul.f32 %v300, %v604
  %v713 = vmul.f32 %v301, %v605
  %v714 = vmul.f32 %v302, %v594
  %v715 = vmul.f32 %v303, %v595
  %v716 = vmul.f32 %v304, %v596
  %v717 = vmul.f32 %v305, %v597
  %v718 = vmul.f32 %v306, %v598
  %v719 = vmul.f32 %v307, %v599
  %v720 = vmul.f32 %v308, %v600
  %v721 = vmul.f32 %v309, %v601
  %v722 = vmul.f32 %v310, %v602
  %v723 = vmul.f32 %v311, %v603
  %v724 = vmul.f32 %v312, %v604
  %v725 = vmul.f32 %v313, %v605
  %v726 = vmul.f32 %v314, %v594
  %v727 = vmul.f32 %v315, %v595
  %v728 = vmul.f32 %v316, %v596
  %v729 = vmul.f32 %v317, %v597
  %v730 = vmul.f32 %v318, %v598
  %v731 = vmul.f32 %v319, %v599
  %v732 = vmul.f32 %v320, %v600
  %v733 = vmul.f32 %v321, %v601
  %v734 = vmul.f32 %v322, %v602
  %v735 = vmul.f32 %v323, %v603
  %v736 = vmul.f32 %v324, %v604
  %v737 = vmul.f32 %v325, %v605
  %v738 = vmul.f32 %v326, %v594
  %v739 = vmul.f32 %v327, %v595
  %v740 = vmul.f32 %v328, %v596
  %v741 = vmul.f32 %v329, %v597
  %v742 = vmul.f32 %v330, %v598
  %v743 = vmul.f32 %v331, %v599
  %v744 = vmul.f32 %v332, %v600
  %v745 = vmul.f32 %v333, %v601
  %v746 = vmul.f32 %v334, %v602
  %v747 = vmul.f32 %v335, %v603
  %v748 = vmul.f32 %v336, %v604
  %v749 = vmul.f32 %v337, %v605
  %v750 = vmul.f32 %v338, %v594
  %v751 = vmul.f32 %v339, %v595
  %v752 = vmul.f32 %v340, %v596
  %v753 = vmul.f32 %v341, %v597
  %v754 = vmul.f32 %v342, %v598
  %v755 = vmul.f32 %v343, %v599
  %v756 = vmul.f32 %v344, %v600
  %v757 = vmul.f32 %v345, %v601
  %v758 = vmul.f32 %v346, %v602
  %v759 = vmul.f32 %v347, %v603
  %v760 = vmul.f32 %v348, %v604
  %v761 = vmul.f32 %v349, %v605
  %v762 = vmul.f32 %v350, %v594
  %v763 = vmul.f32 %v351, %v595
  %v764 = vmul.f32 %v352, %v596
  %v765 = vmul.f32 %v353, %v597
  %v766 = vmul.f32 %v354, %v598
  %v767 = vmul.f32 %v355, %v599
  %v768 = vmul.f32 %v356, %v600
  %v769 = vmul.f32 %v357, %v601
  %v770 = vmul.f32 %v358, %v602
  %v771 = vmul.f32 %v359, %v603
  %v772 = vmul.f32 %v360, %v604
  %v773 = vmul.f32 %v361, %v605
  %v774 = vmul.f32 %v362, %v594
  %v775 = vmul.f32 %v363, %v595
  %v776 = vmul.f32 %v364, %v596
  %v777 = vmul.f32 %v365, %v597
  %v778 = vmul.f32 %v366, %v598
  %v779 = vmul.f32 %v367, %v599
  %v780 = vmul.f32 %v368, %v600
  %v781 = vmul.f32 %v369, %v601
  %v782 = vmul.f32 %v370, %v602
  %v783 = vmul.f32 %v371, %v603
  %v784 = vmul.f32 %v372, %v604
  %v785 = vmul.f32 %v373, %v605
  %v786 = vmul.f32 %v374, %v594
  %v787 = vmul.f32 %v375, %v595
  %v788 = vmul.f32 %v376, %v596
  %v789 = vmul.f32 %v377, %v597
  %v790 = vmul.f32 %v378, %v598
  %v791 = vmul.f32 %v379, %v599
  %v792 = vmul.f32 %v380, %v600
  %v793 = vmul.f32 %v381, %v601
  %v794 = vmul.f32 %v382, %v602
  %v795 = vmul.f32 %v383, %v603
  %v796 = vmul.f32 %v384, %v604
  %v797 = vmul.f32 %v385, %v605
  %v798 = vmul.f32 %v386, %v594
  %v799 = vmul.f32 %v387, %v595
  %v800 = vmul.f32 %v388, %v596
  %v801 = vmul.f32 %v389, %v597
  %v802 = vmul.f32 %v390, %v598
  %v803 = vmul.f32 %v391, %v599
  %v804 = vmul.f32 %v392, %v600
  %v805 = vmul.f32 %v393, %v601
  %v806 = vmul.f32 %v394, %v602
  %v807 = vmul.f32 %v395, %v603
  %v808 = vmul.f32 %v396, %v604
  %v809 = vmul.f32 %v397, %v605
  %v810 = vmul.f32 %v398, %v594
  %v811 = vmul.f32 %v399, %v595
  %v812 = vmul.f32 %v400, %v596
  %v813 = vmul.f32 %v401, %v597
  %v814 = vmul.f32 %v402, %v598
  %v815 = vmul.f32 %v403, %v599
  %v816 = vmul.f32 %v404, %v600
  %v817 = vmul.f32 %v405, %v601
  %v818 = vmul.f32 %v406, %v602
  %v819 = vmul.f32 %v407, %v603
  %v820 = vmul.f32 %v408, %v604
  %v821 = vmul.f32 %v409, %v605
  %v822 = vmul.f32 %v410, %v594
  %v823 = vmul.f32 %v411, %v595
  %v824 = vmul.f32 %v412, %v596
  %v825 = vmul.f32 %v413, %v597
  %v826 = vmul.f32 %v414, %v598
  %v827 = vmul.f32 %v415, %v599
  %v828 = vmul.f32 %v416, %v600
  %v829 = vmul.f32 %v417, %v601
  %v830 = vmul.f32 %v418, %v602
  %v831 = vmul.f32 %v419, %v603
  %v832 = vmul.f32 %v420, %v604
  %v833 = vmul.f32 %v421, %v605
  %v834 = vmul.f32 %v422, %v594
  %v835 = vmul.f32 %v423, %v595
  %v836 = vmul.f32 %v424, %v596
  %v837 = vmul.f32 %v425, %v597
  %v838 = vmul.f32 %v426, %v598
  %v839 = vmul.f32 %v427, %v599
  %v840 = vmul.f32 %v428, %v600
  %v841 = vmul.f32 %v429, %v601
  %v842 = vmul.f32 %v430, %v602
  %v843 = vmul.f32 %v431, %v603
  %v844 = vmul.f32 %v432, %v604
  %v845 = vmul.f32 %v433, %v605
  %v846 = vmul.f32 %v434, %v594
  %v847 = vmul.f32 %v435, %v595
  %v848 = vmul.f32 %v436, %v596
  %v849 = vmul.f32 %v437, %v597
  %v850 = vmul.f32 %v438, %v598
  %v851 = vmul.f32 %v439, %v599
  %v852 = vmul.f32 %v440, %v600
  %v853 = vmul.f32 %v441, %v601
  %v854 = vmul.f32 %v442, %v602
  %v855 = vmul.f32 %v443, %v603
  %v856 = vmul.f32 %v444, %v604
  %v857 = vmul.f32 %v445, %v605
  %v858 = vmul.f32 %v446, %v594
  %v859 = vmul.f32 %v447, %v595
  %v860 = vmul.f32 %v448, %v596
  %v861 = vmul.f32 %v449, %v597
  %v862 = vmul.f32 %v450, %v598
  %v863 = vmul.f32 %v451, %v599
  %v864 = vmul.f32 %v452, %v600
  %v865 = vmul.f32 %v453, %v601
  %v866 = vmul.f32 %v454, %v602
  %v867 = vmul.f32 %v455, %v603
  %v868 = vmul.f32 %v456, %v604
  %v869 = vmul.f32 %v457, %v605
  %v870 = vmul.f32 %v458, %v594
  %v871 = vmul.f32 %v459, %v595
  %v872 = vmul.f32 %v460, %v596
  %v873 = vmul.f32 %v461, %v597
  %v874 = vmul.f32 %v462, %v598
  %v875 = vmul.f32 %v463, %v599
  %v876 = vmul.f32 %v464, %v600
  %v877 = vmul.f32 %v465, %v601
  %v878 = vmul.f32 %v466, %v602
  %v879 = vmul.f32 %v467, %v603
  %v880 = vmul.f32 %v468, %v604
  %v881 = vmul.f32 %v469, %v605
  %v882 = vmul.f32 %v470, %v594
  %v883 = vmul.f32 %v471, %v595
  %v884 = vmul.f32 %v472, %v596
  %v885 = vmul.f32 %v473, %v597
  %v886 = vmul.f32 %v474, %v598
  %v887 = vmul.f32 %v475, %v599
  %v888 = vmul.f32 %v476, %v600
  %v889 = vmul.f32 %v477, %v601
  %v890 = vmul.f32 %v478, %v602
  %v891 = vmul.f32 %v479, %v603
  %v892 = vmul.f32 %v480, %v604
  %v893 = vmul.f32 %v481, %v605
  %v894 = vmul.f32 %v482, %v594
  %v895 = vmul.f32 %v483, %v595
  %v896 = vmul.f32 %v484, %v596
  %v897 = vmul.f32 %v485, %v597
  %v898 = vmul.f32 %v486, %v598
  %v899 = vmul.f32 %v487, %v599
  %v900 = vmul.f32 %v488, %v600
  %v901 = vmul.f32 %v489, %v601
  %v902 = vmul.f32 %v490, %v602
  %v903 = vmul.f32 %v491, %v603
  %v904 = vmul.f32 %v492, %v604
  %v905 = vmul.f32 %v493, %v605
  %v906 = vmul.f32 %v494, %v594
  %v907 = vmul.f32 %v495, %v595
  %v908 = vmul.f32 %v496, %v596
  %v909 = vmul.f32 %v497, %v597
  %v910 = vmul.f32 %v498, %v598
  %v911 = vmul.f32 %v499, %v599
  %v912 = vmul.f32 %v500, %v600
  %v913 = vmul.f32 %v501, %v601
  %v914 = vmul.f32 %v502, %v602
  %v915 = vmul.f32 %v503, %v603
  %v916 = vmul.f32 %v504, %v604
  %v917 = vmul.f32 %v505, %v605
  %v918 = vmul.f32 %v506, %v594
  %v919 = vmul.f32 %v507, %v595
  %v920 = vmul.f32 %v508, %v596
  %v921 = vmul.f32 %v509, %v597
  %v922 = vmul.f32 %v510, %v598
  %v923 = vmul.f32 %v511, %v599
  %v924 = vmul.f32 %v512, %v600
  %v925 = vmul.f32 %v513, %v601
  %v926 = vmul.f32 %v514, %v602
  %v927 = vmul.f32 %v515, %v603
  %v928 = vmul.f32 %v516, %v604
  %v929 = vmul.f32 %v517, %v605
  %v930 = vmul.f32 %v518, %v594
  %v931 = vmul.f32 %v519, %v595
  %v932 = vmul.f32 %v520, %v596
  %v933 = vmul.f32 %v521, %v597
  %v934 = vmul.f32 %v522, %v598
  %v935 = vmul.f32 %v523, %v599
  %v936 = vmul.f32 %v524, %v600
  %v937 = vmul.f32 %v525, %v601
  %v938 = vmul.f32 %v526, %v602
  %v939 = vmul.f32 %v527, %v603
  %v940 = vmul.f32 %v528, %v604
  %v941 = vmul.f32 %v529, %v605
  %v942 = vmul.f32 %v530, %v594
  %v943 = vmul.f32 %v531, %v595
  %v944 = vmul.f32 %v532, %v596
  %v945 = vmul.f32 %v533, %v597
  %v946 = vmul.f32 %v534, %v598
  %v947 = vmul.f32 %v535, %v599
  %v948 = vmul.f32 %v536, %v600
  %v949 = vmul.f32 %v537, %v601
  %v950 = vmul.f32 %v538, %v602
  %v951 = vmul.f32 %v539, %v603
  %v952 = vmul.f32 %v540, %v604
  %v953 = vmul.f32 %v541, %v605
  %v954 = vmul.f32 %v542, %v594
  %v955 = vmul.f32 %v543, %v595
  %v956 = vmul.f32 %v544, %v596
  %v957 = vmul.f32 %v545, %v597
  %v958 = vmul.f32 %v546, %v598
  %v959 = vmul.f32 %v547, %v599
  %v960 = vmul.f32 %v548, %v600
  %v961 = vmul.f32 %v549, %v601
  %v962 = vmul.f32 %v550, %v602
  %v963 = vmul.f32 %v551, %v603
  %v964 = vmul.f32 %v552, %v604
  %v965 = vmul.f32 %v553, %v605
  %v966 = vmul.f32 %v554, %v594
  %v967 = vmul.f32 %v555, %v595
  %v968 = vmul.f32 %v556, %v596
  %v969 = vmul.f32 %v557, %v597
  %v970 = vmul.f32 %v558, %v598
  %v971 = vmul.f32 %v559, %v599
  %v972 = vmul.f32 %v560, %v600
  %v973 = vmul.f32 %v561, %v601
  %v974 = vmul.f32 %v562, %v602
  %v975 = vmul.f32 %v563, %v603
  %v976 = vmul.f32 %v564, %v604
  %v977 = vmul.f32 %v565, %v605
  %v978 = vmul.f32 %v566, %v594
  %v979 = vmul.f32 %v567, %v595
  %v980 = vmul.f32 %v568, %v596
  %v981 = vmul.f32 %v569, %v597
  %v982 = vmul.f32 %v570, %v598
  %v983 = vmul.f32 %v571, %v599
  %v984 = vmul.f32 %v572, %v600
  %v985 = vmul.f32 %v573, %v601
  %v986 = vmul.f32 %v574, %v602
  %v987 = vmul.f32 %v575, %v603
  %v988 = vmul.f32 %v576, %v604
  %v989 = vmul.f32 %v577, %v605
  %v990 = vmul.f32 %v578, %v594
  %v991 = vmul.f32 %v579, %v595
  %v992 = vmul.f32 %v580, %v596
  %v993 = vmul.f32 %v581, %v597
  %v994 = vmul.f32 %v582, %v598
  %v995 = vmul.f32 %v583, %v599
  %v996 = vmul.f32 %v584, %v600
  %v997 = vmul.f32 %v585, %v601
  %v998 = vmul.f32 %v586, %v602
  %v999 = vmul.f32 %v587, %v603
  %v1000 = vmul.f32 %v588, %v604
  %v1001 = vmul.f32 %v589, %v605
  %v1002 = vpack.c.bf16 %v630, %v618
  %v1003 = vpack.c.bf16 %v631, %v619
  %v1004 = vpack.c.bf16 %v632, %v620
  %v1005 = vpack.c.bf16 %v633, %v621
  %v1006 = vpack.c.bf16 %v634, %v622
  %v1007 = vpack.c.bf16 %v635, %v623
  %v1008 = vpack.c.bf16 %v636, %v624
  %v1009 = vpack.c.bf16 %v637, %v625
  %v1010 = vpack.c.bf16 %v638, %v626
  %v1011 = vpack.c.bf16 %v639, %v627
  %v1012 = vpack.c.bf16 %v640, %v628
  %v1013 = vpack.c.bf16 %v641, %v629
  %v1014 = vpack.c.bf16 %v654, %v642
  %v1015 = vpack.c.bf16 %v655, %v643
  %v1016 = vpack.c.bf16 %v656, %v644
  %v1017 = vpack.c.bf16 %v657, %v645
  %v1018 = vpack.c.bf16 %v658, %v646
  %v1019 = vpack.c.bf16 %v659, %v647
  %v1020 = vpack.c.bf16 %v660, %v648
  %v1021 = vpack.c.bf16 %v661, %v649
  %v1022 = vpack.c.bf16 %v662, %v650
  %v1023 = vpack.c.bf16 %v663, %v651
  %v1024 = vpack.c.bf16 %v664, %v652
  %v1025 = vpack.c.bf16 %v665, %v653
  %v1026 = vpack.c.bf16 %v678, %v666
  %v1027 = vpack.c.bf16 %v679, %v667
  %v1028 = vpack.c.bf16 %v680, %v668
  %v1029 = vpack.c.bf16 %v681, %v669
  %v1030 = vpack.c.bf16 %v682, %v670
  %v1031 = vpack.c.bf16 %v683, %v671
  %v1032 = vpack.c.bf16 %v684, %v672
  %v1033 = vpack.c.bf16 %v685, %v673
  %v1034 = vpack.c.bf16 %v686, %v674
  %v1035 = vpack.c.bf16 %v687, %v675
  %v1036 = vpack.c.bf16 %v688, %v676
  %v1037 = vpack.c.bf16 %v689, %v677
  %v1038 = vpack.c.bf16 %v702, %v690
  %v1039 = vpack.c.bf16 %v703, %v691
  %v1040 = vpack.c.bf16 %v704, %v692
  %v1041 = vpack.c.bf16 %v705, %v693
  %v1042 = vpack.c.bf16 %v706, %v694
  %v1043 = vpack.c.bf16 %v707, %v695
  %v1044 = vpack.c.bf16 %v708, %v696
  %v1045 = vpack.c.bf16 %v709, %v697
  %v1046 = vpack.c.bf16 %v710, %v698
  %v1047 = vpack.c.bf16 %v711, %v699
  %v1048 = vpack.c.bf16 %v712, %v700
  %v1049 = vpack.c.bf16 %v713, %v701
  %v1050 = vpack.c.bf16 %v726, %v714
  %v1051 = vpack.c.bf16 %v727, %v715
  %v1052 = vpack.c.bf16 %v728, %v716
  %v1053 = vpack.c.bf16 %v729, %v717
  %v1054 = vpack.c.bf16 %v730, %v718
  %v1055 = vpack.c.bf16 %v731, %v719
  %v1056 = vpack.c.bf16 %v732, %v720
  %v1057 = vpack.c.bf16 %v733, %v721
  %v1058 = vpack.c.bf16 %v734, %v722
  %v1059 = vpack.c.bf16 %v735, %v723
  %v1060 = vpack.c.bf16 %v736, %v724
  %v1061 = vpack.c.bf16 %v737, %v725
  %v1062 = vpack.c.bf16 %v750, %v738
  %v1063 = vpack.c.bf16 %v751, %v739
  %v1064 = vpack.c.bf16 %v752, %v740
  %v1065 = vpack.c.bf16 %v753, %v741
  %v1066 = vpack.c.bf16 %v754, %v742
  %v1067 = vpack.c.bf16 %v755, %v743
  %v1068 = vpack.c.bf16 %v756, %v744
  %v1069 = vpack.c.bf16 %v757, %v745
  %v1070 = vpack.c.bf16 %v758, %v746
  %v1071 = vpack.c.bf16 %v759, %v747
  %v1072 = vpack.c.bf16 %v760, %v748
  %v1073 = vpack.c.bf16 %v761, %v749
  %v1074 = vpack.c.bf16 %v774, %v762
  %v1075 = vpack.c.bf16 %v775, %v763
  %v1076 = vpack.c.bf16 %v776, %v764
  %v1077 = vpack.c.bf16 %v777, %v765
  %v1078 = vpack.c.bf16 %v778, %v766
  %v1079 = vpack.c.bf16 %v779, %v767
  %v1080 = vpack.c.bf16 %v780, %v768
  %v1081 = vpack.c.bf16 %v781, %v769
  %v1082 = vpack.c.bf16 %v782, %v770
  %v1083 = vpack.c.bf16 %v783, %v771
  %v1084 = vpack.c.bf16 %v784, %v772
  %v1085 = vpack.c.bf16 %v785, %v773
  %v1086 = vpack.c.bf16 %v798, %v786
  %v1087 = vpack.c.bf16 %v799, %v787
  %v1088 = vpack.c.bf16 %v800, %v788
  %v1089 = vpack.c.bf16 %v801, %v789
  %v1090 = vpack.c.bf16 %v802, %v790
  %v1091 = vpack.c.bf16 %v803, %v791
  %v1092 = vpack.c.bf16 %v804, %v792
  %v1093 = vpack.c.bf16 %v805, %v793
  %v1094 = vpack.c.bf16 %v806, %v794
  %v1095 = vpack.c.bf16 %v807, %v795
  %v1096 = vpack.c.bf16 %v808, %v796
  %v1097 = vpack.c.bf16 %v809, %v797
  %v1098 = vpack.c.bf16 %v822, %v810
  %v1099 = vpack.c.bf16 %v823, %v811
  %v1100 = vpack.c.bf16 %v824, %v812
  %v1101 = vpack.c.bf16 %v825, %v813
  %v1102 = vpack.c.bf16 %v826, %v814
  %v1103 = vpack.c.bf16 %v827, %v815
  %v1104 = vpack.c.bf16 %v828, %v816
  %v1105 = vpack.c.bf16 %v829, %v817
  %v1106 = vpack.c.bf16 %v830, %v818
  %v1107 = vpack.c.bf16 %v831, %v819
  %v1108 = vpack.c.bf16 %v832, %v820
  %v1109 = vpack.c.bf16 %v833, %v821
  %v1110 = vpack.c.bf16 %v846, %v834
  %v1111 = vpack.c.bf16 %v847, %v835
  %v1112 = vpack.c.bf16 %v848, %v836
  %v1113 = vpack.c.bf16 %v849, %v837
  %v1114 = vpack.c.bf16 %v850, %v838
  %v1115 = vpack.c.bf16 %v851, %v839
  %v1116 = vpack.c.bf16 %v852, %v840
  %v1117 = vpack.c.bf16 %v853, %v841
  %v1118 = vpack.c.bf16 %v854, %v842
  %v1119 = vpack.c.bf16 %v855, %v843
  %v1120 = vpack.c.bf16 %v856, %v844
  %v1121 = vpack.c.bf16 %v857, %v845
  %v1122 = vpack.c.bf16 %v870, %v858
  %v1123 = vpack.c.bf16 %v871, %v859
  %v1124 = vpack.c.bf16 %v872, %v860
  %v1125 = vpack.c.bf16 %v873, %v861
  %v1126 = vpack.c.bf16 %v874, %v862
  %v1127 = vpack.c.bf16 %v875, %v863
  %v1128 = vpack.c.bf16 %v876, %v864
  %v1129 = vpack.c.bf16 %v877, %v865
  %v1130 = vpack.c.bf16 %v878, %v866
  %v1131 = vpack.c.bf16 %v879, %v867
  %v1132 = vpack.c.bf16 %v880, %v868
  %v1133 = vpack.c.bf16 %v881, %v869
  %v1134 = vpack.c.bf16 %v894, %v882
  %v1135 = vpack.c.bf16 %v895, %v883
  %v1136 = vpack.c.bf16 %v896, %v884
  %v1137 = vpack.c.bf16 %v897, %v885
  %v1138 = vpack.c.bf16 %v898, %v886
  %v1139 = vpack.c.bf16 %v899, %v887
  %v1140 = vpack.c.bf16 %v900, %v888
  %v1141 = vpack.c.bf16 %v901, %v889
  %v1142 = vpack.c.bf16 %v902, %v890
  %v1143 = vpack.c.bf16 %v903, %v891
  %v1144 = vpack.c.bf16 %v904, %v892
  %v1145 = vpack.c.bf16 %v905, %v893
  %v1146 = vpack.c.bf16 %v918, %v906
  %v1147 = vpack.c.bf16 %v919, %v907
  %v1148 = vpack.c.bf16 %v920, %v908
  %v1149 = vpack.c.bf16 %v921, %v909
  %v1150 = vpack.c.bf16 %v922, %v910
  %v1151 = vpack.c.bf16 %v923, %v911
  %v1152 = vpack.c.bf16 %v924, %v912
  %v1153 = vpack.c.bf16 %v925, %v913
  %v1154 = vpack.c.bf16 %v926, %v914
  %v1155 = vpack.c.bf16 %v927, %v915
  %v1156 = vpack.c.bf16 %v928, %v916
  %v1157 = vpack.c.bf16 %v929, %v917
  %v1158 = vpack.c.bf16 %v942, %v930
  %v1159 = vpack.c.bf16 %v943, %v931
  %v1160 = vpack.c.bf16 %v944, %v932
  %v1161 = vpack.c.bf16 %v945, %v933
  %v1162 = vpack.c.bf16 %v946, %v934
  %v1163 = vpack.c.bf16 %v947, %v935
  %v1164 = vpack.c.bf16 %v948, %v936
  %v1165 = vpack.c.bf16 %v949, %v937
  %v1166 = vpack.c.bf16 %v950, %v938
  %v1167 = vpack.c.bf16 %v951, %v939
  %v1168 = vpack.c.bf16 %v952, %v940
  %v1169 = vpack.c.bf16 %v953, %v941
  %v1170 = vpack.c.bf16 %v966, %v954
  %v1171 = vpack.c.bf16 %v967, %v955
  %v1172 = vpack.c.bf16 %v968, %v956
  %v1173 = vpack.c.bf16 %v969, %v957
  %v1174 = vpack.c.bf16 %v970, %v958
  %v1175 = vpack.c.bf16 %v971, %v959
  %v1176 = vpack.c.bf16 %v972, %v960
  %v1177 = vpack.c.bf16 %v973, %v961
  %v1178 = vpack.c.bf16 %v974, %v962
  %v1179 = vpack.c.bf16 %v975, %v963
  %v1180 = vpack.c.bf16 %v976, %v964
  %v1181 = vpack.c.bf16 %v977, %v965
  %v1182 = vpack.c.bf16 %v990, %v978
  %v1183 = vpack.c.bf16 %v991, %v979
  %v1184 = vpack.c.bf16 %v992, %v980
  %v1185 = vpack.c.bf16 %v993, %v981
  %v1186 = vpack.c.bf16 %v994, %v982
  %v1187 = vpack.c.bf16 %v995, %v983
  %v1188 = vpack.c.bf16 %v996, %v984
  %v1189 = vpack.c.bf16 %v997, %v985
  %v1190 = vpack.c.bf16 %v998, %v986
  %v1191 = vpack.c.bf16 %v999, %v987
  %v1192 = vpack.c.bf16 %v1000, %v988
  %v1193 = vpack.c.bf16 %v1001, %v989
  %v1194 = vld [vmem:[%s1] sm:$0xff]
  %v1195 = vld [vmem:[%s1 + $0x8] sm:$0xff]
  %v1196 = vld [vmem:[%s1 + $0x10] sm:$0xff]
  %v1197 = vld [vmem:[%s1 + $0x18] sm:$0xff]
  %v1198 = vld [vmem:[%s1 + $0x20] sm:$0xff]
  %v1199 = vld [vmem:[%s1 + $0x28] sm:$0xff]
  %v1200 = vld [vmem:[%s1 + $0x30] sm:$0xff]
  %v1201 = vld [vmem:[%s1 + $0x38] sm:$0xff]
  %v1202 = vld [vmem:[%s1 + $0x40] sm:$0xff]
  %v1203 = vld [vmem:[%s1 + $0x48] sm:$0xff]
  %v1204 = vld [vmem:[%s1 + $0x50] sm:$0xff]
  %v1205 = vld [vmem:[%s1 + $0x58] sm:$0xff]
  %v1206 = vld [vmem:[%s1 + $0x60] sm:$0xff]
  %v1207 = vld [vmem:[%s1 + $0x68] sm:$0xff]
  %v1208 = vld [vmem:[%s1 + $0x70] sm:$0xff]
  %v1209 = vld [vmem:[%s1 + $0x78] sm:$0xff]
  %v1210 = vld [vmem:[%s1 + $0x80] sm:$0xff]
  %v1211 = vld [vmem:[%s1 + $0x88] sm:$0xff]
  %v1212 = vld [vmem:[%s1 + $0x90] sm:$0xff]
  %v1213 = vld [vmem:[%s1 + $0x98] sm:$0xff]
  %v1214 = vld [vmem:[%s1 + $0xa0] sm:$0xff]
  %v1215 = vld [vmem:[%s1 + $0xa8] sm:$0xff]
  %v1216 = vld [vmem:[%s1 + $0xb0] sm:$0xff]
  %v1217 = vld [vmem:[%s1 + $0xb8] sm:$0xff]
  %v1218 = vld [vmem:[%s1 + $0xc0] sm:$0xff]
  %v1219 = vld [vmem:[%s1 + $0xc8] sm:$0xff]
  %v1220 = vld [vmem:[%s1 + $0xd0] sm:$0xff]
  %v1221 = vld [vmem:[%s1 + $0xd8] sm:$0xff]
  %v1222 = vld [vmem:[%s1 + $0xe0] sm:$0xff]
  %v1223 = vld [vmem:[%s1 + $0xe8] sm:$0xff]
  %v1224 = vld [vmem:[%s1 + $0xf0] sm:$0xff]
  %v1225 = vld [vmem:[%s1 + $0xf8] sm:$0xff]
  %v1226 = vld [vmem:[%s1 + $0x100] sm:$0xff]
  %v1227 = vld [vmem:[%s1 + $0x108] sm:$0xff]
  %v1228 = vld [vmem:[%s1 + $0x110] sm:$0xff]
  %v1229 = vld [vmem:[%s1 + $0x118] sm:$0xff]
  %v1230 = vld [vmem:[%s1 + $0x120] sm:$0xff]
  %v1231 = vld [vmem:[%s1 + $0x128] sm:$0xff]
  %v1232 = vld [vmem:[%s1 + $0x130] sm:$0xff]
  %v1233 = vld [vmem:[%s1 + $0x138] sm:$0xff]
  %v1234 = vld [vmem:[%s1 + $0x140] sm:$0xff]
  %v1235 = vld [vmem:[%s1 + $0x148] sm:$0xff]
  %v1236 = vld [vmem:[%s1 + $0x150] sm:$0xff]
  %v1237 = vld [vmem:[%s1 + $0x158] sm:$0xff]
  %v1238 = vld [vmem:[%s1 + $0x160] sm:$0xff]
  %v1239 = vld [vmem:[%s1 + $0x168] sm:$0xff]
  %v1240 = vld [vmem:[%s1 + $0x170] sm:$0xff]
  %v1241 = vld [vmem:[%s1 + $0x178] sm:$0xff]
  %v1242 = vld [vmem:[%s1 + $0x180] sm:$0xff]
  %v1243 = vld [vmem:[%s1 + $0x188] sm:$0xff]
  %v1244 = vld [vmem:[%s1 + $0x190] sm:$0xff]
  %v1245 = vld [vmem:[%s1 + $0x198] sm:$0xff]
  %v1246 = vld [vmem:[%s1 + $0x1a0] sm:$0xff]
  %v1247 = vld [vmem:[%s1 + $0x1a8] sm:$0xff]
  %v1248 = vld [vmem:[%s1 + $0x1b0] sm:$0xff]
  %v1249 = vld [vmem:[%s1 + $0x1b8] sm:$0xff]
  %v1250 = vld [vmem:[%s1 + $0x1c0] sm:$0xff]
  %v1251 = vld [vmem:[%s1 + $0x1c8] sm:$0xff]
  %v1252 = vld [vmem:[%s1 + $0x1d0] sm:$0xff]
  %v1253 = vld [vmem:[%s1 + $0x1d8] sm:$0xff]
  %v1254 = vld [vmem:[%s1 + $0x1e0] sm:$0xff]
  %v1255 = vld [vmem:[%s1 + $0x1e8] sm:$0xff]
  %v1256 = vld [vmem:[%s1 + $0x1f0] sm:$0xff]
  %v1257 = vld [vmem:[%s1 + $0x1f8] sm:$0xff]
  %v1258 = vld [vmem:[%s1 + $0x200] sm:$0xff]
  %v1259 = vld [vmem:[%s1 + $0x208] sm:$0xff]
  %v1260 = vld [vmem:[%s1 + $0x210] sm:$0xff]
  %v1261 = vld [vmem:[%s1 + $0x218] sm:$0xff]
  %v1262 = vld [vmem:[%s1 + $0x220] sm:$0xff]
  %v1263 = vld [vmem:[%s1 + $0x228] sm:$0xff]
  %v1264 = vld [vmem:[%s1 + $0x230] sm:$0xff]
  %v1265 = vld [vmem:[%s1 + $0x238] sm:$0xff]
  %v1266 = vld [vmem:[%s1 + $0x240] sm:$0xff]
  %v1267 = vld [vmem:[%s1 + $0x248] sm:$0xff]
  %v1268 = vld [vmem:[%s1 + $0x250] sm:$0xff]
  %v1269 = vld [vmem:[%s1 + $0x258] sm:$0xff]
  %v1270 = vld [vmem:[%s1 + $0x260] sm:$0xff]
  %v1271 = vld [vmem:[%s1 + $0x268] sm:$0xff]
  %v1272 = vld [vmem:[%s1 + $0x270] sm:$0xff]
  %v1273 = vld [vmem:[%s1 + $0x278] sm:$0xff]
  %v1274 = vld [vmem:[%s1 + $0x280] sm:$0xff]
  %v1275 = vld [vmem:[%s1 + $0x288] sm:$0xff]
  %v1276 = vld [vmem:[%s1 + $0x290] sm:$0xff]
  %v1277 = vld [vmem:[%s1 + $0x298] sm:$0xff]
  %v1278 = vld [vmem:[%s1 + $0x2a0] sm:$0xff]
  %v1279 = vld [vmem:[%s1 + $0x2a8] sm:$0xff]
  %v1280 = vld [vmem:[%s1 + $0x2b0] sm:$0xff]
  %v1281 = vld [vmem:[%s1 + $0x2b8] sm:$0xff]
  %v1282 = vld [vmem:[%s1 + $0x2c0] sm:$0xff]
  %v1283 = vld [vmem:[%s1 + $0x2c8] sm:$0xff]
  %v1284 = vld [vmem:[%s1 + $0x2d0] sm:$0xff]
  %v1285 = vld [vmem:[%s1 + $0x2d8] sm:$0xff]
  %v1286 = vld [vmem:[%s1 + $0x2e0] sm:$0xff]
  %v1287 = vld [vmem:[%s1 + $0x2e8] sm:$0xff]
  %v1288 = vld [vmem:[%s1 + $0x2f0] sm:$0xff]
  %v1289 = vld [vmem:[%s1 + $0x2f8] sm:$0xff]
  %v1290 = vld [vmem:[%s1 + $0x300] sm:$0xff]
  %v1291 = vld [vmem:[%s1 + $0x308] sm:$0xff]
  %v1292 = vld [vmem:[%s1 + $0x310] sm:$0xff]
  %v1293 = vld [vmem:[%s1 + $0x318] sm:$0xff]
  %v1294 = vld [vmem:[%s1 + $0x320] sm:$0xff]
  %v1295 = vld [vmem:[%s1 + $0x328] sm:$0xff]
  %v1296 = vld [vmem:[%s1 + $0x330] sm:$0xff]
  %v1297 = vld [vmem:[%s1 + $0x338] sm:$0xff]
  %v1298 = vld [vmem:[%s1 + $0x340] sm:$0xff]
  %v1299 = vld [vmem:[%s1 + $0x348] sm:$0xff]
  %v1300 = vld [vmem:[%s1 + $0x350] sm:$0xff]
  %v1301 = vld [vmem:[%s1 + $0x358] sm:$0xff]
  %v1302 = vld [vmem:[%s1 + $0x360] sm:$0xff]
  %v1303 = vld [vmem:[%s1 + $0x368] sm:$0xff]
  %v1304 = vld [vmem:[%s1 + $0x370] sm:$0xff]
  %v1305 = vld [vmem:[%s1 + $0x378] sm:$0xff]
  %v1306 = vld [vmem:[%s1 + $0x380] sm:$0xff]
  %v1307 = vld [vmem:[%s1 + $0x388] sm:$0xff]
  %v1308 = vld [vmem:[%s1 + $0x390] sm:$0xff]
  %v1309 = vld [vmem:[%s1 + $0x398] sm:$0xff]
  %v1310 = vld [vmem:[%s1 + $0x3a0] sm:$0xff]
  %v1311 = vld [vmem:[%s1 + $0x3a8] sm:$0xff]
  %v1312 = vld [vmem:[%s1 + $0x3b0] sm:$0xff]
  %v1313 = vld [vmem:[%s1 + $0x3b8] sm:$0xff]
  %v1314 = vld [vmem:[%s1 + $0x3c0] sm:$0xff]
  %v1315 = vld [vmem:[%s1 + $0x3c8] sm:$0xff]
  %v1316 = vld [vmem:[%s1 + $0x3d0] sm:$0xff]
  %v1317 = vld [vmem:[%s1 + $0x3d8] sm:$0xff]
  %v1318 = vld [vmem:[%s1 + $0x3e0] sm:$0xff]
  %v1319 = vld [vmem:[%s1 + $0x3e8] sm:$0xff]
  %v1320 = vld [vmem:[%s1 + $0x3f0] sm:$0xff]
  %v1321 = vld [vmem:[%s1 + $0x3f8] sm:$0xff]
  %v1322 = vld [vmem:[%s1 + $0x400] sm:$0xff]
  %v1323 = vld [vmem:[%s1 + $0x408] sm:$0xff]
  %v1324 = vld [vmem:[%s1 + $0x410] sm:$0xff]
  %v1325 = vld [vmem:[%s1 + $0x418] sm:$0xff]
  %v1326 = vld [vmem:[%s1 + $0x420] sm:$0xff]
  %v1327 = vld [vmem:[%s1 + $0x428] sm:$0xff]
  %v1328 = vld [vmem:[%s1 + $0x430] sm:$0xff]
  %v1329 = vld [vmem:[%s1 + $0x438] sm:$0xff]
  %v1330 = vld [vmem:[%s1 + $0x440] sm:$0xff]
  %v1331 = vld [vmem:[%s1 + $0x448] sm:$0xff]
  %v1332 = vld [vmem:[%s1 + $0x450] sm:$0xff]
  %v1333 = vld [vmem:[%s1 + $0x458] sm:$0xff]
  %v1334 = vld [vmem:[%s1 + $0x460] sm:$0xff]
  %v1335 = vld [vmem:[%s1 + $0x468] sm:$0xff]
  %v1336 = vld [vmem:[%s1 + $0x470] sm:$0xff]
  %v1337 = vld [vmem:[%s1 + $0x478] sm:$0xff]
  %v1338 = vld [vmem:[%s1 + $0x480] sm:$0xff]
  %v1339 = vld [vmem:[%s1 + $0x488] sm:$0xff]
  %v1340 = vld [vmem:[%s1 + $0x490] sm:$0xff]
  %v1341 = vld [vmem:[%s1 + $0x498] sm:$0xff]
  %v1342 = vld [vmem:[%s1 + $0x4a0] sm:$0xff]
  %v1343 = vld [vmem:[%s1 + $0x4a8] sm:$0xff]
  %v1344 = vld [vmem:[%s1 + $0x4b0] sm:$0xff]
  %v1345 = vld [vmem:[%s1 + $0x4b8] sm:$0xff]
  %v1346 = vld [vmem:[%s1 + $0x4c0] sm:$0xff]
  %v1347 = vld [vmem:[%s1 + $0x4c8] sm:$0xff]
  %v1348 = vld [vmem:[%s1 + $0x4d0] sm:$0xff]
  %v1349 = vld [vmem:[%s1 + $0x4d8] sm:$0xff]
  %v1350 = vld [vmem:[%s1 + $0x4e0] sm:$0xff]
  %v1351 = vld [vmem:[%s1 + $0x4e8] sm:$0xff]
  %v1352 = vld [vmem:[%s1 + $0x4f0] sm:$0xff]
  %v1353 = vld [vmem:[%s1 + $0x4f8] sm:$0xff]
  %v1354 = vld [vmem:[%s1 + $0x500] sm:$0xff]
  %v1355 = vld [vmem:[%s1 + $0x508] sm:$0xff]
  %v1356 = vld [vmem:[%s1 + $0x510] sm:$0xff]
  %v1357 = vld [vmem:[%s1 + $0x518] sm:$0xff]
  %v1358 = vld [vmem:[%s1 + $0x520] sm:$0xff]
  %v1359 = vld [vmem:[%s1 + $0x528] sm:$0xff]
  %v1360 = vld [vmem:[%s1 + $0x530] sm:$0xff]
  %v1361 = vld [vmem:[%s1 + $0x538] sm:$0xff]
  %v1362 = vld [vmem:[%s1 + $0x540] sm:$0xff]
  %v1363 = vld [vmem:[%s1 + $0x548] sm:$0xff]
  %v1364 = vld [vmem:[%s1 + $0x550] sm:$0xff]
  %v1365 = vld [vmem:[%s1 + $0x558] sm:$0xff]
  %v1366 = vld [vmem:[%s1 + $0x560] sm:$0xff]
  %v1367 = vld [vmem:[%s1 + $0x568] sm:$0xff]
  %v1368 = vld [vmem:[%s1 + $0x570] sm:$0xff]
  %v1369 = vld [vmem:[%s1 + $0x578] sm:$0xff]
  %v1370 = vld [vmem:[%s1 + $0x580] sm:$0xff]
  %v1371 = vld [vmem:[%s1 + $0x588] sm:$0xff]
  %v1372 = vld [vmem:[%s1 + $0x590] sm:$0xff]
  %v1373 = vld [vmem:[%s1 + $0x598] sm:$0xff]
  %v1374 = vld [vmem:[%s1 + $0x5a0] sm:$0xff]
  %v1375 = vld [vmem:[%s1 + $0x5a8] sm:$0xff]
  %v1376 = vld [vmem:[%s1 + $0x5b0] sm:$0xff]
  %v1377 = vld [vmem:[%s1 + $0x5b8] sm:$0xff]
  %v1378 = vld [vmem:[%s1 + $0x5c0] sm:$0xff]
  %v1379 = vld [vmem:[%s1 + $0x5c8] sm:$0xff]
  %v1380 = vld [vmem:[%s1 + $0x5d0] sm:$0xff]
  %v1381 = vld [vmem:[%s1 + $0x5d8] sm:$0xff]
  %v1382 = vld [vmem:[%s1 + $0x5e0] sm:$0xff]
  %v1383 = vld [vmem:[%s1 + $0x5e8] sm:$0xff]
  %v1384 = vld [vmem:[%s1 + $0x5f0] sm:$0xff]
  %v1385 = vld [vmem:[%s1 + $0x5f8] sm:$0xff]
  %v1386 = vpack.c.bf16 %v1195, %v1194
  %v1387 = vpack.c.bf16 %v1197, %v1196
  %v1388 = vpack.c.bf16 %v1199, %v1198
  %v1389 = vpack.c.bf16 %v1201, %v1200
  %v1390 = vpack.c.bf16 %v1203, %v1202
  %v1391 = vpack.c.bf16 %v1205, %v1204
  %v1392 = vpack.c.bf16 %v1207, %v1206
  %v1393 = vpack.c.bf16 %v1209, %v1208
  %v1394 = vpack.c.bf16 %v1211, %v1210
  %v1395 = vpack.c.bf16 %v1213, %v1212
  %v1396 = vpack.c.bf16 %v1215, %v1214
  %v1397 = vpack.c.bf16 %v1217, %v1216
  %v1398 = vpack.c.bf16 %v1219, %v1218
  %v1399 = vpack.c.bf16 %v1221, %v1220
  %v1400 = vpack.c.bf16 %v1223, %v1222
  %v1401 = vpack.c.bf16 %v1225, %v1224
  %v1402 = vpack.c.bf16 %v1227, %v1226
  %v1403 = vpack.c.bf16 %v1229, %v1228
  %v1404 = vpack.c.bf16 %v1231, %v1230
  %v1405 = vpack.c.bf16 %v1233, %v1232
  %v1406 = vpack.c.bf16 %v1235, %v1234
  %v1407 = vpack.c.bf16 %v1237, %v1236
  %v1408 = vpack.c.bf16 %v1239, %v1238
  %v1409 = vpack.c.bf16 %v1241, %v1240
  %v1410 = vpack.c.bf16 %v1243, %v1242
  %v1411 = vpack.c.bf16 %v1245, %v1244
  %v1412 = vpack.c.bf16 %v1247, %v1246
  %v1413 = vpack.c.bf16 %v1249, %v1248
  %v1414 = vpack.c.bf16 %v1251, %v1250
  %v1415 = vpack.c.bf16 %v1253, %v1252
  %v1416 = vpack.c.bf16 %v1255, %v1254
  %v1417 = vpack.c.bf16 %v1257, %v1256
  %v1418 = vpack.c.bf16 %v1259, %v1258
  %v1419 = vpack.c.bf16 %v1261, %v1260
  %v1420 = vpack.c.bf16 %v1263, %v1262
  %v1421 = vpack.c.bf16 %v1265, %v1264
  %v1422 = vpack.c.bf16 %v1267, %v1266
  %v1423 = vpack.c.bf16 %v1269, %v1268
  %v1424 = vpack.c.bf16 %v1271, %v1270
  %v1425 = vpack.c.bf16 %v1273, %v1272
  %v1426 = vpack.c.bf16 %v1275, %v1274
  %v1427 = vpack.c.bf16 %v1277, %v1276
  %v1428 = vpack.c.bf16 %v1279, %v1278
  %v1429 = vpack.c.bf16 %v1281, %v1280
  %v1430 = vpack.c.bf16 %v1283, %v1282
  %v1431 = vpack.c.bf16 %v1285, %v1284
  %v1432 = vpack.c.bf16 %v1287, %v1286
  %v1433 = vpack.c.bf16 %v1289, %v1288
  %v1434 = vpack.c.bf16 %v1291, %v1290
  %v1435 = vpack.c.bf16 %v1293, %v1292
  %v1436 = vpack.c.bf16 %v1295, %v1294
  %v1437 = vpack.c.bf16 %v1297, %v1296
  %v1438 = vpack.c.bf16 %v1299, %v1298
  %v1439 = vpack.c.bf16 %v1301, %v1300
  %v1440 = vpack.c.bf16 %v1303, %v1302
  %v1441 = vpack.c.bf16 %v1305, %v1304
  %v1442 = vpack.c.bf16 %v1307, %v1306
  %v1443 = vpack.c.bf16 %v1309, %v1308
  %v1444 = vpack.c.bf16 %v1311, %v1310
  %v1445 = vpack.c.bf16 %v1313, %v1312
  %v1446 = vpack.c.bf16 %v1315, %v1314
  %v1447 = vpack.c.bf16 %v1317, %v1316
  %v1448 = vpack.c.bf16 %v1319, %v1318
  %v1449 = vpack.c.bf16 %v1321, %v1320
  %v1450 = vpack.c.bf16 %v1323, %v1322
  %v1451 = vpack.c.bf16 %v1325, %v1324
  %v1452 = vpack.c.bf16 %v1327, %v1326
  %v1453 = vpack.c.bf16 %v1329, %v1328
  %v1454 = vpack.c.bf16 %v1331, %v1330
  %v1455 = vpack.c.bf16 %v1333, %v1332
  %v1456 = vpack.c.bf16 %v1335, %v1334
  %v1457 = vpack.c.bf16 %v1337, %v1336
  %v1458 = vpack.c.bf16 %v1339, %v1338
  %v1459 = vpack.c.bf16 %v1341, %v1340
  %v1460 = vpack.c.bf16 %v1343, %v1342
  %v1461 = vpack.c.bf16 %v1345, %v1344
  %v1462 = vpack.c.bf16 %v1347, %v1346
  %v1463 = vpack.c.bf16 %v1349, %v1348
  %v1464 = vpack.c.bf16 %v1351, %v1350
  %v1465 = vpack.c.bf16 %v1353, %v1352
  %v1466 = vpack.c.bf16 %v1355, %v1354
  %v1467 = vpack.c.bf16 %v1357, %v1356
  %v1468 = vpack.c.bf16 %v1359, %v1358
  %v1469 = vpack.c.bf16 %v1361, %v1360
  %v1470 = vpack.c.bf16 %v1363, %v1362
  %v1471 = vpack.c.bf16 %v1365, %v1364
  %v1472 = vpack.c.bf16 %v1367, %v1366
  %v1473 = vpack.c.bf16 %v1369, %v1368
  %v1474 = vpack.c.bf16 %v1371, %v1370
  %v1475 = vpack.c.bf16 %v1373, %v1372
  %v1476 = vpack.c.bf16 %v1375, %v1374
  %v1477 = vpack.c.bf16 %v1377, %v1376
  %v1478 = vpack.c.bf16 %v1379, %v1378
  %v1479 = vpack.c.bf16 %v1381, %v1380
  %v1480 = vpack.c.bf16 %v1383, %v1382
  %v1481 = vpack.c.bf16 %v1385, %v1384
  %1482 = vmatpush.bf16.msra.mxu0 %v1393
  %1483 = vmatpush.bf16.msra.mxu0 %v1392
  %1484 = vmatpush.bf16.msra.mxu0 %v1391
  %1485 = vmatpush.bf16.msra.mxu0 %v1390
  %1486 = vmatpush.bf16.msra.mxu0 %v1389
  %1487 = vmatpush.bf16.msra.mxu0 %v1388
  %1488 = vmatpush.bf16.msra.mxu0 %v1387
  %1489 = vmatpush.bf16.msra.mxu0 %v1386
  %1490 = vmatmul.bf16.gmra.mxu0 %v1002
  %v1491 = vpop.f32.mrf.mxu0
  %v1492 = vadd.f32 0.0, %v1491
  %v1493 = vpop.f32.mrf.mxu0
  %v1494 = vadd.f32 0.0, %v1493
  %1495 = vmatmul.bf16.gmra.mxu0 %v1014
  %v1496 = vpop.f32.mrf.mxu0
  %v1497 = vadd.f32 0.0, %v1496
  %v1498 = vpop.f32.mrf.mxu0
  %v1499 = vadd.f32 0.0, %v1498
  %1500 = vmatmul.bf16.gmra.mxu0 %v1026
  %v1501 = vpop.f32.mrf.mxu0
  %v1502 = vadd.f32 0.0, %v1501
  %v1503 = vpop.f32.mrf.mxu0
  %v1504 = vadd.f32 0.0, %v1503
  %1505 = vmatmul.bf16.gmra.mxu0 %v1038
  %v1506 = vpop.f32.mrf.mxu0
  %v1507 = vadd.f32 0.0, %v1506
  %v1508 = vpop.f32.mrf.mxu0
  %v1509 = vadd.f32 0.0, %v1508
  %1510 = vmatmul.bf16.gmra.mxu0 %v1050
  %v1511 = vpop.f32.mrf.mxu0
  %v1512 = vadd.f32 0.0, %v1511
  %v1513 = vpop.f32.mrf.mxu0
  %v1514 = vadd.f32 0.0, %v1513
  %1515 = vmatmul.bf16.gmra.mxu0 %v1062
  %v1516 = vpop.f32.mrf.mxu0
  %v1517 = vadd.f32 0.0, %v1516
  %v1518 = vpop.f32.mrf.mxu0
  %v1519 = vadd.f32 0.0, %v1518
  %1520 = vmatmul.bf16.gmra.mxu0 %v1074
  %v1521 = vpop.f32.mrf.mxu0
  %v1522 = vadd.f32 0.0, %v1521
  %v1523 = vpop.f32.mrf.mxu0
  %v1524 = vadd.f32 0.0, %v1523
  %1525 = vmatmul.bf16.gmra.mxu0 %v1086
  %v1526 = vpop.f32.mrf.mxu0
  %v1527 = vadd.f32 0.0, %v1526
  %v1528 = vpop.f32.mrf.mxu0
  %v1529 = vadd.f32 0.0, %v1528
  %1530 = vmatmul.bf16.gmra.mxu0 %v1098
  %v1531 = vpop.f32.mrf.mxu0
  %v1532 = vadd.f32 0.0, %v1531
  %v1533 = vpop.f32.mrf.mxu0
  %v1534 = vadd.f32 0.0, %v1533
  %1535 = vmatmul.bf16.gmra.mxu0 %v1110
  %v1536 = vpop.f32.mrf.mxu0
  %v1537 = vadd.f32 0.0, %v1536
  %v1538 = vpop.f32.mrf.mxu0
  %v1539 = vadd.f32 0.0, %v1538
  %1540 = vmatmul.bf16.gmra.mxu0 %v1122
  %v1541 = vpop.f32.mrf.mxu0
  %v1542 = vadd.f32 0.0, %v1541
  %v1543 = vpop.f32.mrf.mxu0
  %v1544 = vadd.f32 0.0, %v1543
  %1545 = vmatmul.bf16.gmra.mxu0 %v1134
  %v1546 = vpop.f32.mrf.mxu0
  %v1547 = vadd.f32 0.0, %v1546
  %v1548 = vpop.f32.mrf.mxu0
  %v1549 = vadd.f32 0.0, %v1548
  %1550 = vmatmul.bf16.gmra.mxu0 %v1146
  %v1551 = vpop.f32.mrf.mxu0
  %v1552 = vadd.f32 0.0, %v1551
  %v1553 = vpop.f32.mrf.mxu0
  %v1554 = vadd.f32 0.0, %v1553
  %1555 = vmatmul.bf16.gmra.mxu0 %v1158
  %v1556 = vpop.f32.mrf.mxu0
  %v1557 = vadd.f32 0.0, %v1556
  %v1558 = vpop.f32.mrf.mxu0
  %v1559 = vadd.f32 0.0, %v1558
  %1560 = vmatmul.bf16.gmra.mxu0 %v1170
  %v1561 = vpop.f32.mrf.mxu0
  %v1562 = vadd.f32 0.0, %v1561
  %v1563 = vpop.f32.mrf.mxu0
  %v1564 = vadd.f32 0.0, %v1563
  %1565 = vmatmul.bf16.gmra.mxu0 %v1182
  %v1566 = vpop.f32.mrf.mxu0
  %v1567 = vadd.f32 0.0, %v1566
  %v1568 = vpop.f32.mrf.mxu0
  %v1569 = vadd.f32 0.0, %v1568
  %1570 = vdwg.mxu0
  %1571 = vmatpush.bf16.msra.mxu0 %v1401
  %1572 = vmatpush.bf16.msra.mxu0 %v1400
  %1573 = vmatpush.bf16.msra.mxu0 %v1399
  %1574 = vmatpush.bf16.msra.mxu0 %v1398
  %1575 = vmatpush.bf16.msra.mxu0 %v1397
  %1576 = vmatpush.bf16.msra.mxu0 %v1396
  %1577 = vmatpush.bf16.msra.mxu0 %v1395
  %1578 = vmatpush.bf16.msra.mxu0 %v1394
  %1579 = vmatmul.bf16.gmra.mxu0 %v1003
  %v1580 = vpop.f32.mrf.mxu0
  %v1581 = vadd.f32 %v1492, %v1580
  %v1582 = vpop.f32.mrf.mxu0
  %v1583 = vadd.f32 %v1494, %v1582
  %1584 = vmatmul.bf16.gmra.mxu0 %v1015
  %v1585 = vpop.f32.mrf.mxu0
  %v1586 = vadd.f32 %v1497, %v1585
  %v1587 = vpop.f32.mrf.mxu0
  %v1588 = vadd.f32 %v1499, %v1587
  %1589 = vmatmul.bf16.gmra.mxu0 %v1027
  %v1590 = vpop.f32.mrf.mxu0
  %v1591 = vadd.f32 %v1502, %v1590
  %v1592 = vpop.f32.mrf.mxu0
  %v1593 = vadd.f32 %v1504, %v1592
  %1594 = vmatmul.bf16.gmra.mxu0 %v1039
  %v1595 = vpop.f32.mrf.mxu0
  %v1596 = vadd.f32 %v1507, %v1595
  %v1597 = vpop.f32.mrf.mxu0
  %v1598 = vadd.f32 %v1509, %v1597
  %1599 = vmatmul.bf16.gmra.mxu0 %v1051
  %v1600 = vpop.f32.mrf.mxu0
  %v1601 = vadd.f32 %v1512, %v1600
  %v1602 = vpop.f32.mrf.mxu0
  %v1603 = vadd.f32 %v1514, %v1602
  %1604 = vmatmul.bf16.gmra.mxu0 %v1063
  %v1605 = vpop.f32.mrf.mxu0
  %v1606 = vadd.f32 %v1517, %v1605
  %v1607 = vpop.f32.mrf.mxu0
  %v1608 = vadd.f32 %v1519, %v1607
  %1609 = vmatmul.bf16.gmra.mxu0 %v1075
  %v1610 = vpop.f32.mrf.mxu0
  %v1611 = vadd.f32 %v1522, %v1610
  %v1612 = vpop.f32.mrf.mxu0
  %v1613 = vadd.f32 %v1524, %v1612
  %1614 = vmatmul.bf16.gmra.mxu0 %v1087
  %v1615 = vpop.f32.mrf.mxu0
  %v1616 = vadd.f32 %v1527, %v1615
  %v1617 = vpop.f32.mrf.mxu0
  %v1618 = vadd.f32 %v1529, %v1617
  %1619 = vmatmul.bf16.gmra.mxu0 %v1099
  %v1620 = vpop.f32.mrf.mxu0
  %v1621 = vadd.f32 %v1532, %v1620
  %v1622 = vpop.f32.mrf.mxu0
  %v1623 = vadd.f32 %v1534, %v1622
  %1624 = vmatmul.bf16.gmra.mxu0 %v1111
  %v1625 = vpop.f32.mrf.mxu0
  %v1626 = vadd.f32 %v1537, %v1625
  %v1627 = vpop.f32.mrf.mxu0
  %v1628 = vadd.f32 %v1539, %v1627
  %1629 = vmatmul.bf16.gmra.mxu0 %v1123
  %v1630 = vpop.f32.mrf.mxu0
  %v1631 = vadd.f32 %v1542, %v1630
  %v1632 = vpop.f32.mrf.mxu0
  %v1633 = vadd.f32 %v1544, %v1632
  %1634 = vmatmul.bf16.gmra.mxu0 %v1135
  %v1635 = vpop.f32.mrf.mxu0
  %v1636 = vadd.f32 %v1547, %v1635
  %v1637 = vpop.f32.mrf.mxu0
  %v1638 = vadd.f32 %v1549, %v1637
  %1639 = vmatmul.bf16.gmra.mxu0 %v1147
  %v1640 = vpop.f32.mrf.mxu0
  %v1641 = vadd.f32 %v1552, %v1640
  %v1642 = vpop.f32.mrf.mxu0
  %v1643 = vadd.f32 %v1554, %v1642
  %1644 = vmatmul.bf16.gmra.mxu0 %v1159
  %v1645 = vpop.f32.mrf.mxu0
  %v1646 = vadd.f32 %v1557, %v1645
  %v1647 = vpop.f32.mrf.mxu0
  %v1648 = vadd.f32 %v1559, %v1647
  %1649 = vmatmul.bf16.gmra.mxu0 %v1171
  %v1650 = vpop.f32.mrf.mxu0
  %v1651 = vadd.f32 %v1562, %v1650
  %v1652 = vpop.f32.mrf.mxu0
  %v1653 = vadd.f32 %v1564, %v1652
  %1654 = vmatmul.bf16.gmra.mxu0 %v1183
  %v1655 = vpop.f32.mrf.mxu0
  %v1656 = vadd.f32 %v1567, %v1655
  %v1657 = vpop.f32.mrf.mxu0
  %v1658 = vadd.f32 %v1569, %v1657
  %1659 = vdwg.mxu0
  %1660 = vmatpush.bf16.msra.mxu0 %v1409
  %1661 = vmatpush.bf16.msra.mxu0 %v1408
  %1662 = vmatpush.bf16.msra.mxu0 %v1407
  %1663 = vmatpush.bf16.msra.mxu0 %v1406
  %1664 = vmatpush.bf16.msra.mxu0 %v1405
  %1665 = vmatpush.bf16.msra.mxu0 %v1404
  %1666 = vmatpush.bf16.msra.mxu0 %v1403
  %1667 = vmatpush.bf16.msra.mxu0 %v1402
  %1668 = vmatmul.bf16.gmra.mxu0 %v1004
  %v1669 = vpop.f32.mrf.mxu0
  %v1670 = vadd.f32 %v1581, %v1669
  %v1671 = vpop.f32.mrf.mxu0
  %v1672 = vadd.f32 %v1583, %v1671
  %1673 = vmatmul.bf16.gmra.mxu0 %v1016
  %v1674 = vpop.f32.mrf.mxu0
  %v1675 = vadd.f32 %v1586, %v1674
  %v1676 = vpop.f32.mrf.mxu0
  %v1677 = vadd.f32 %v1588, %v1676
  %1678 = vmatmul.bf16.gmra.mxu0 %v1028
  %v1679 = vpop.f32.mrf.mxu0
  %v1680 = vadd.f32 %v1591, %v1679
  %v1681 = vpop.f32.mrf.mxu0
  %v1682 = vadd.f32 %v1593, %v1681
  %1683 = vmatmul.bf16.gmra.mxu0 %v1040
  %v1684 = vpop.f32.mrf.mxu0
  %v1685 = vadd.f32 %v1596, %v1684
  %v1686 = vpop.f32.mrf.mxu0
  %v1687 = vadd.f32 %v1598, %v1686
  %1688 = vmatmul.bf16.gmra.mxu0 %v1052
  %v1689 = vpop.f32.mrf.mxu0
  %v1690 = vadd.f32 %v1601, %v1689
  %v1691 = vpop.f32.mrf.mxu0
  %v1692 = vadd.f32 %v1603, %v1691
  %1693 = vmatmul.bf16.gmra.mxu0 %v1064
  %v1694 = vpop.f32.mrf.mxu0
  %v1695 = vadd.f32 %v1606, %v1694
  %v1696 = vpop.f32.mrf.mxu0
  %v1697 = vadd.f32 %v1608, %v1696
  %1698 = vmatmul.bf16.gmra.mxu0 %v1076
  %v1699 = vpop.f32.mrf.mxu0
  %v1700 = vadd.f32 %v1611, %v1699
  %v1701 = vpop.f32.mrf.mxu0
  %v1702 = vadd.f32 %v1613, %v1701
  %1703 = vmatmul.bf16.gmra.mxu0 %v1088
  %v1704 = vpop.f32.mrf.mxu0
  %v1705 = vadd.f32 %v1616, %v1704
  %v1706 = vpop.f32.mrf.mxu0
  %v1707 = vadd.f32 %v1618, %v1706
  %1708 = vmatmul.bf16.gmra.mxu0 %v1100
  %v1709 = vpop.f32.mrf.mxu0
  %v1710 = vadd.f32 %v1621, %v1709
  %v1711 = vpop.f32.mrf.mxu0
  %v1712 = vadd.f32 %v1623, %v1711
  %1713 = vmatmul.bf16.gmra.mxu0 %v1112
  %v1714 = vpop.f32.mrf.mxu0
  %v1715 = vadd.f32 %v1626, %v1714
  %v1716 = vpop.f32.mrf.mxu0
  %v1717 = vadd.f32 %v1628, %v1716
  %1718 = vmatmul.bf16.gmra.mxu0 %v1124
  %v1719 = vpop.f32.mrf.mxu0
  %v1720 = vadd.f32 %v1631, %v1719
  %v1721 = vpop.f32.mrf.mxu0
  %v1722 = vadd.f32 %v1633, %v1721
  %1723 = vmatmul.bf16.gmra.mxu0 %v1136
  %v1724 = vpop.f32.mrf.mxu0
  %v1725 = vadd.f32 %v1636, %v1724
  %v1726 = vpop.f32.mrf.mxu0
  %v1727 = vadd.f32 %v1638, %v1726
  %1728 = vmatmul.bf16.gmra.mxu0 %v1148
  %v1729 = vpop.f32.mrf.mxu0
  %v1730 = vadd.f32 %v1641, %v1729
  %v1731 = vpop.f32.mrf.mxu0
  %v1732 = vadd.f32 %v1643, %v1731
  %1733 = vmatmul.bf16.gmra.mxu0 %v1160
  %v1734 = vpop.f32.mrf.mxu0
  %v1735 = vadd.f32 %v1646, %v1734
  %v1736 = vpop.f32.mrf.mxu0
  %v1737 = vadd.f32 %v1648, %v1736
  %1738 = vmatmul.bf16.gmra.mxu0 %v1172
  %v1739 = vpop.f32.mrf.mxu0
  %v1740 = vadd.f32 %v1651, %v1739
  %v1741 = vpop.f32.mrf.mxu0
  %v1742 = vadd.f32 %v1653, %v1741
  %1743 = vmatmul.bf16.gmra.mxu0 %v1184
  %v1744 = vpop.f32.mrf.mxu0
  %v1745 = vadd.f32 %v1656, %v1744
  %v1746 = vpop.f32.mrf.mxu0
  %v1747 = vadd.f32 %v1658, %v1746
  %1748 = vdwg.mxu0
  %1749 = vmatpush.bf16.msra.mxu0 %v1417
  %1750 = vmatpush.bf16.msra.mxu0 %v1416
  %1751 = vmatpush.bf16.msra.mxu0 %v1415
  %1752 = vmatpush.bf16.msra.mxu0 %v1414
  %1753 = vmatpush.bf16.msra.mxu0 %v1413
  %1754 = vmatpush.bf16.msra.mxu0 %v1412
  %1755 = vmatpush.bf16.msra.mxu0 %v1411
  %1756 = vmatpush.bf16.msra.mxu0 %v1410
  %1757 = vmatmul.bf16.gmra.mxu0 %v1005
  %v1758 = vpop.f32.mrf.mxu0
  %v1759 = vadd.f32 %v1670, %v1758
  %v1760 = vpop.f32.mrf.mxu0
  %v1761 = vadd.f32 %v1672, %v1760
  %1762 = vmatmul.bf16.gmra.mxu0 %v1017
  %v1763 = vpop.f32.mrf.mxu0
  %v1764 = vadd.f32 %v1675, %v1763
  %v1765 = vpop.f32.mrf.mxu0
  %v1766 = vadd.f32 %v1677, %v1765
  %1767 = vmatmul.bf16.gmra.mxu0 %v1029
  %v1768 = vpop.f32.mrf.mxu0
  %v1769 = vadd.f32 %v1680, %v1768
  %v1770 = vpop.f32.mrf.mxu0
  %v1771 = vadd.f32 %v1682, %v1770
  %1772 = vmatmul.bf16.gmra.mxu0 %v1041
  %v1773 = vpop.f32.mrf.mxu0
  %v1774 = vadd.f32 %v1685, %v1773
  %v1775 = vpop.f32.mrf.mxu0
  %v1776 = vadd.f32 %v1687, %v1775
  %1777 = vmatmul.bf16.gmra.mxu0 %v1053
  %v1778 = vpop.f32.mrf.mxu0
  %v1779 = vadd.f32 %v1690, %v1778
  %v1780 = vpop.f32.mrf.mxu0
  %v1781 = vadd.f32 %v1692, %v1780
  %1782 = vmatmul.bf16.gmra.mxu0 %v1065
  %v1783 = vpop.f32.mrf.mxu0
  %v1784 = vadd.f32 %v1695, %v1783
  %v1785 = vpop.f32.mrf.mxu0
  %v1786 = vadd.f32 %v1697, %v1785
  %1787 = vmatmul.bf16.gmra.mxu0 %v1077
  %v1788 = vpop.f32.mrf.mxu0
  %v1789 = vadd.f32 %v1700, %v1788
  %v1790 = vpop.f32.mrf.mxu0
  %v1791 = vadd.f32 %v1702, %v1790
  %1792 = vmatmul.bf16.gmra.mxu0 %v1089
  %v1793 = vpop.f32.mrf.mxu0
  %v1794 = vadd.f32 %v1705, %v1793
  %v1795 = vpop.f32.mrf.mxu0
  %v1796 = vadd.f32 %v1707, %v1795
  %1797 = vmatmul.bf16.gmra.mxu0 %v1101
  %v1798 = vpop.f32.mrf.mxu0
  %v1799 = vadd.f32 %v1710, %v1798
  %v1800 = vpop.f32.mrf.mxu0
  %v1801 = vadd.f32 %v1712, %v1800
  %1802 = vmatmul.bf16.gmra.mxu0 %v1113
  %v1803 = vpop.f32.mrf.mxu0
  %v1804 = vadd.f32 %v1715, %v1803
  %v1805 = vpop.f32.mrf.mxu0
  %v1806 = vadd.f32 %v1717, %v1805
  %1807 = vmatmul.bf16.gmra.mxu0 %v1125
  %v1808 = vpop.f32.mrf.mxu0
  %v1809 = vadd.f32 %v1720, %v1808
  %v1810 = vpop.f32.mrf.mxu0
  %v1811 = vadd.f32 %v1722, %v1810
  %1812 = vmatmul.bf16.gmra.mxu0 %v1137
  %v1813 = vpop.f32.mrf.mxu0
  %v1814 = vadd.f32 %v1725, %v1813
  %v1815 = vpop.f32.mrf.mxu0
  %v1816 = vadd.f32 %v1727, %v1815
  %1817 = vmatmul.bf16.gmra.mxu0 %v1149
  %v1818 = vpop.f32.mrf.mxu0
  %v1819 = vadd.f32 %v1730, %v1818
  %v1820 = vpop.f32.mrf.mxu0
  %v1821 = vadd.f32 %v1732, %v1820
  %1822 = vmatmul.bf16.gmra.mxu0 %v1161
  %v1823 = vpop.f32.mrf.mxu0
  %v1824 = vadd.f32 %v1735, %v1823
  %v1825 = vpop.f32.mrf.mxu0
  %v1826 = vadd.f32 %v1737, %v1825
  %1827 = vmatmul.bf16.gmra.mxu0 %v1173
  %v1828 = vpop.f32.mrf.mxu0
  %v1829 = vadd.f32 %v1740, %v1828
  %v1830 = vpop.f32.mrf.mxu0
  %v1831 = vadd.f32 %v1742, %v1830
  %1832 = vmatmul.bf16.gmra.mxu0 %v1185
  %v1833 = vpop.f32.mrf.mxu0
  %v1834 = vadd.f32 %v1745, %v1833
  %v1835 = vpop.f32.mrf.mxu0
  %v1836 = vadd.f32 %v1747, %v1835
  %1837 = vdwg.mxu0
  %1838 = vmatpush.bf16.msra.mxu0 %v1425
  %1839 = vmatpush.bf16.msra.mxu0 %v1424
  %1840 = vmatpush.bf16.msra.mxu0 %v1423
  %1841 = vmatpush.bf16.msra.mxu0 %v1422
  %1842 = vmatpush.bf16.msra.mxu0 %v1421
  %1843 = vmatpush.bf16.msra.mxu0 %v1420
  %1844 = vmatpush.bf16.msra.mxu0 %v1419
  %1845 = vmatpush.bf16.msra.mxu0 %v1418
  %1846 = vmatmul.bf16.gmra.mxu0 %v1006
  %v1847 = vpop.f32.mrf.mxu0
  %v1848 = vadd.f32 %v1759, %v1847
  %v1849 = vpop.f32.mrf.mxu0
  %v1850 = vadd.f32 %v1761, %v1849
  %1851 = vmatmul.bf16.gmra.mxu0 %v1018
  %v1852 = vpop.f32.mrf.mxu0
  %v1853 = vadd.f32 %v1764, %v1852
  %v1854 = vpop.f32.mrf.mxu0
  %v1855 = vadd.f32 %v1766, %v1854
  %1856 = vmatmul.bf16.gmra.mxu0 %v1030
  %v1857 = vpop.f32.mrf.mxu0
  %v1858 = vadd.f32 %v1769, %v1857
  %v1859 = vpop.f32.mrf.mxu0
  %v1860 = vadd.f32 %v1771, %v1859
  %1861 = vmatmul.bf16.gmra.mxu0 %v1042
  %v1862 = vpop.f32.mrf.mxu0
  %v1863 = vadd.f32 %v1774, %v1862
  %v1864 = vpop.f32.mrf.mxu0
  %v1865 = vadd.f32 %v1776, %v1864
  %1866 = vmatmul.bf16.gmra.mxu0 %v1054
  %v1867 = vpop.f32.mrf.mxu0
  %v1868 = vadd.f32 %v1779, %v1867
  %v1869 = vpop.f32.mrf.mxu0
  %v1870 = vadd.f32 %v1781, %v1869
  %1871 = vmatmul.bf16.gmra.mxu0 %v1066
  %v1872 = vpop.f32.mrf.mxu0
  %v1873 = vadd.f32 %v1784, %v1872
  %v1874 = vpop.f32.mrf.mxu0
  %v1875 = vadd.f32 %v1786, %v1874
  %1876 = vmatmul.bf16.gmra.mxu0 %v1078
  %v1877 = vpop.f32.mrf.mxu0
  %v1878 = vadd.f32 %v1789, %v1877
  %v1879 = vpop.f32.mrf.mxu0
  %v1880 = vadd.f32 %v1791, %v1879
  %1881 = vmatmul.bf16.gmra.mxu0 %v1090
  %v1882 = vpop.f32.mrf.mxu0
  %v1883 = vadd.f32 %v1794, %v1882
  %v1884 = vpop.f32.mrf.mxu0
  %v1885 = vadd.f32 %v1796, %v1884
  %1886 = vmatmul.bf16.gmra.mxu0 %v1102
  %v1887 = vpop.f32.mrf.mxu0
  %v1888 = vadd.f32 %v1799, %v1887
  %v1889 = vpop.f32.mrf.mxu0
  %v1890 = vadd.f32 %v1801, %v1889
  %1891 = vmatmul.bf16.gmra.mxu0 %v1114
  %v1892 = vpop.f32.mrf.mxu0
  %v1893 = vadd.f32 %v1804, %v1892
  %v1894 = vpop.f32.mrf.mxu0
  %v1895 = vadd.f32 %v1806, %v1894
  %1896 = vmatmul.bf16.gmra.mxu0 %v1126
  %v1897 = vpop.f32.mrf.mxu0
  %v1898 = vadd.f32 %v1809, %v1897
  %v1899 = vpop.f32.mrf.mxu0
  %v1900 = vadd.f32 %v1811, %v1899
  %1901 = vmatmul.bf16.gmra.mxu0 %v1138
  %v1902 = vpop.f32.mrf.mxu0
  %v1903 = vadd.f32 %v1814, %v1902
  %v1904 = vpop.f32.mrf.mxu0
  %v1905 = vadd.f32 %v1816, %v1904
  %1906 = vmatmul.bf16.gmra.mxu0 %v1150
  %v1907 = vpop.f32.mrf.mxu0
  %v1908 = vadd.f32 %v1819, %v1907
  %v1909 = vpop.f32.mrf.mxu0
  %v1910 = vadd.f32 %v1821, %v1909
  %1911 = vmatmul.bf16.gmra.mxu0 %v1162
  %v1912 = vpop.f32.mrf.mxu0
  %v1913 = vadd.f32 %v1824, %v1912
  %v1914 = vpop.f32.mrf.mxu0
  %v1915 = vadd.f32 %v1826, %v1914
  %1916 = vmatmul.bf16.gmra.mxu0 %v1174
  %v1917 = vpop.f32.mrf.mxu0
  %v1918 = vadd.f32 %v1829, %v1917
  %v1919 = vpop.f32.mrf.mxu0
  %v1920 = vadd.f32 %v1831, %v1919
  %1921 = vmatmul.bf16.gmra.mxu0 %v1186
  %v1922 = vpop.f32.mrf.mxu0
  %v1923 = vadd.f32 %v1834, %v1922
  %v1924 = vpop.f32.mrf.mxu0
  %v1925 = vadd.f32 %v1836, %v1924
  %1926 = vdwg.mxu0
  %1927 = vmatpush.bf16.msra.mxu0 %v1433
  %1928 = vmatpush.bf16.msra.mxu0 %v1432
  %1929 = vmatpush.bf16.msra.mxu0 %v1431
  %1930 = vmatpush.bf16.msra.mxu0 %v1430
  %1931 = vmatpush.bf16.msra.mxu0 %v1429
  %1932 = vmatpush.bf16.msra.mxu0 %v1428
  %1933 = vmatpush.bf16.msra.mxu0 %v1427
  %1934 = vmatpush.bf16.msra.mxu0 %v1426
  %1935 = vmatmul.bf16.gmra.mxu0 %v1007
  %v1936 = vpop.f32.mrf.mxu0
  %v1937 = vadd.f32 %v1848, %v1936
  %v1938 = vpop.f32.mrf.mxu0
  %v1939 = vadd.f32 %v1850, %v1938
  %1940 = vmatmul.bf16.gmra.mxu0 %v1019
  %v1941 = vpop.f32.mrf.mxu0
  %v1942 = vadd.f32 %v1853, %v1941
  %v1943 = vpop.f32.mrf.mxu0
  %v1944 = vadd.f32 %v1855, %v1943
  %1945 = vmatmul.bf16.gmra.mxu0 %v1031
  %v1946 = vpop.f32.mrf.mxu0
  %v1947 = vadd.f32 %v1858, %v1946
  %v1948 = vpop.f32.mrf.mxu0
  %v1949 = vadd.f32 %v1860, %v1948
  %1950 = vmatmul.bf16.gmra.mxu0 %v1043
  %v1951 = vpop.f32.mrf.mxu0
  %v1952 = vadd.f32 %v1863, %v1951
  %v1953 = vpop.f32.mrf.mxu0
  %v1954 = vadd.f32 %v1865, %v1953
  %1955 = vmatmul.bf16.gmra.mxu0 %v1055
  %v1956 = vpop.f32.mrf.mxu0
  %v1957 = vadd.f32 %v1868, %v1956
  %v1958 = vpop.f32.mrf.mxu0
  %v1959 = vadd.f32 %v1870, %v1958
  %1960 = vmatmul.bf16.gmra.mxu0 %v1067
  %v1961 = vpop.f32.mrf.mxu0
  %v1962 = vadd.f32 %v1873, %v1961
  %v1963 = vpop.f32.mrf.mxu0
  %v1964 = vadd.f32 %v1875, %v1963
  %1965 = vmatmul.bf16.gmra.mxu0 %v1079
  %v1966 = vpop.f32.mrf.mxu0
  %v1967 = vadd.f32 %v1878, %v1966
  %v1968 = vpop.f32.mrf.mxu0
  %v1969 = vadd.f32 %v1880, %v1968
  %1970 = vmatmul.bf16.gmra.mxu0 %v1091
  %v1971 = vpop.f32.mrf.mxu0
  %v1972 = vadd.f32 %v1883, %v1971
  %v1973 = vpop.f32.mrf.mxu0
  %v1974 = vadd.f32 %v1885, %v1973
  %1975 = vmatmul.bf16.gmra.mxu0 %v1103
  %v1976 = vpop.f32.mrf.mxu0
  %v1977 = vadd.f32 %v1888, %v1976
  %v1978 = vpop.f32.mrf.mxu0
  %v1979 = vadd.f32 %v1890, %v1978
  %1980 = vmatmul.bf16.gmra.mxu0 %v1115
  %v1981 = vpop.f32.mrf.mxu0
  %v1982 = vadd.f32 %v1893, %v1981
  %v1983 = vpop.f32.mrf.mxu0
  %v1984 = vadd.f32 %v1895, %v1983
  %1985 = vmatmul.bf16.gmra.mxu0 %v1127
  %v1986 = vpop.f32.mrf.mxu0
  %v1987 = vadd.f32 %v1898, %v1986
  %v1988 = vpop.f32.mrf.mxu0
  %v1989 = vadd.f32 %v1900, %v1988
  %1990 = vmatmul.bf16.gmra.mxu0 %v1139
  %v1991 = vpop.f32.mrf.mxu0
  %v1992 = vadd.f32 %v1903, %v1991
  %v1993 = vpop.f32.mrf.mxu0
  %v1994 = vadd.f32 %v1905, %v1993
  %1995 = vmatmul.bf16.gmra.mxu0 %v1151
  %v1996 = vpop.f32.mrf.mxu0
  %v1997 = vadd.f32 %v1908, %v1996
  %v1998 = vpop.f32.mrf.mxu0
  %v1999 = vadd.f32 %v1910, %v1998
  %2000 = vmatmul.bf16.gmra.mxu0 %v1163
  %v2001 = vpop.f32.mrf.mxu0
  %v2002 = vadd.f32 %v1913, %v2001
  %v2003 = vpop.f32.mrf.mxu0
  %v2004 = vadd.f32 %v1915, %v2003
  %2005 = vmatmul.bf16.gmra.mxu0 %v1175
  %v2006 = vpop.f32.mrf.mxu0
  %v2007 = vadd.f32 %v1918, %v2006
  %v2008 = vpop.f32.mrf.mxu0
  %v2009 = vadd.f32 %v1920, %v2008
  %2010 = vmatmul.bf16.gmra.mxu0 %v1187
  %v2011 = vpop.f32.mrf.mxu0
  %v2012 = vadd.f32 %v1923, %v2011
  %v2013 = vpop.f32.mrf.mxu0
  %v2014 = vadd.f32 %v1925, %v2013
  %2015 = vdwg.mxu0
  %2016 = vmatpush.bf16.msra.mxu0 %v1441
  %2017 = vmatpush.bf16.msra.mxu0 %v1440
  %2018 = vmatpush.bf16.msra.mxu0 %v1439
  %2019 = vmatpush.bf16.msra.mxu0 %v1438
  %2020 = vmatpush.bf16.msra.mxu0 %v1437
  %2021 = vmatpush.bf16.msra.mxu0 %v1436
  %2022 = vmatpush.bf16.msra.mxu0 %v1435
  %2023 = vmatpush.bf16.msra.mxu0 %v1434
  %2024 = vmatmul.bf16.gmra.mxu0 %v1008
  %v2025 = vpop.f32.mrf.mxu0
  %v2026 = vadd.f32 %v1937, %v2025
  %v2027 = vpop.f32.mrf.mxu0
  %v2028 = vadd.f32 %v1939, %v2027
  %2029 = vmatmul.bf16.gmra.mxu0 %v1020
  %v2030 = vpop.f32.mrf.mxu0
  %v2031 = vadd.f32 %v1942, %v2030
  %v2032 = vpop.f32.mrf.mxu0
  %v2033 = vadd.f32 %v1944, %v2032
  %2034 = vmatmul.bf16.gmra.mxu0 %v1032
  %v2035 = vpop.f32.mrf.mxu0
  %v2036 = vadd.f32 %v1947, %v2035
  %v2037 = vpop.f32.mrf.mxu0
  %v2038 = vadd.f32 %v1949, %v2037
  %2039 = vmatmul.bf16.gmra.mxu0 %v1044
  %v2040 = vpop.f32.mrf.mxu0
  %v2041 = vadd.f32 %v1952, %v2040
  %v2042 = vpop.f32.mrf.mxu0
  %v2043 = vadd.f32 %v1954, %v2042
  %2044 = vmatmul.bf16.gmra.mxu0 %v1056
  %v2045 = vpop.f32.mrf.mxu0
  %v2046 = vadd.f32 %v1957, %v2045
  %v2047 = vpop.f32.mrf.mxu0
  %v2048 = vadd.f32 %v1959, %v2047
  %2049 = vmatmul.bf16.gmra.mxu0 %v1068
  %v2050 = vpop.f32.mrf.mxu0
  %v2051 = vadd.f32 %v1962, %v2050
  %v2052 = vpop.f32.mrf.mxu0
  %v2053 = vadd.f32 %v1964, %v2052
  %2054 = vmatmul.bf16.gmra.mxu0 %v1080
  %v2055 = vpop.f32.mrf.mxu0
  %v2056 = vadd.f32 %v1967, %v2055
  %v2057 = vpop.f32.mrf.mxu0
  %v2058 = vadd.f32 %v1969, %v2057
  %2059 = vmatmul.bf16.gmra.mxu0 %v1092
  %v2060 = vpop.f32.mrf.mxu0
  %v2061 = vadd.f32 %v1972, %v2060
  %v2062 = vpop.f32.mrf.mxu0
  %v2063 = vadd.f32 %v1974, %v2062
  %2064 = vmatmul.bf16.gmra.mxu0 %v1104
  %v2065 = vpop.f32.mrf.mxu0
  %v2066 = vadd.f32 %v1977, %v2065
  %v2067 = vpop.f32.mrf.mxu0
  %v2068 = vadd.f32 %v1979, %v2067
  %2069 = vmatmul.bf16.gmra.mxu0 %v1116
  %v2070 = vpop.f32.mrf.mxu0
  %v2071 = vadd.f32 %v1982, %v2070
  %v2072 = vpop.f32.mrf.mxu0
  %v2073 = vadd.f32 %v1984, %v2072
  %2074 = vmatmul.bf16.gmra.mxu0 %v1128
  %v2075 = vpop.f32.mrf.mxu0
  %v2076 = vadd.f32 %v1987, %v2075
  %v2077 = vpop.f32.mrf.mxu0
  %v2078 = vadd.f32 %v1989, %v2077
  %2079 = vmatmul.bf16.gmra.mxu0 %v1140
  %v2080 = vpop.f32.mrf.mxu0
  %v2081 = vadd.f32 %v1992, %v2080
  %v2082 = vpop.f32.mrf.mxu0
  %v2083 = vadd.f32 %v1994, %v2082
  %2084 = vmatmul.bf16.gmra.mxu0 %v1152
  %v2085 = vpop.f32.mrf.mxu0
  %v2086 = vadd.f32 %v1997, %v2085
  %v2087 = vpop.f32.mrf.mxu0
  %v2088 = vadd.f32 %v1999, %v2087
  %2089 = vmatmul.bf16.gmra.mxu0 %v1164
  %v2090 = vpop.f32.mrf.mxu0
  %v2091 = vadd.f32 %v2002, %v2090
  %v2092 = vpop.f32.mrf.mxu0
  %v2093 = vadd.f32 %v2004, %v2092
  %2094 = vmatmul.bf16.gmra.mxu0 %v1176
  %v2095 = vpop.f32.mrf.mxu0
  %v2096 = vadd.f32 %v2007, %v2095
  %v2097 = vpop.f32.mrf.mxu0
  %v2098 = vadd.f32 %v2009, %v2097
  %2099 = vmatmul.bf16.gmra.mxu0 %v1188
  %v2100 = vpop.f32.mrf.mxu0
  %v2101 = vadd.f32 %v2012, %v2100
  %v2102 = vpop.f32.mrf.mxu0
  %v2103 = vadd.f32 %v2014, %v2102
  %2104 = vdwg.mxu0
  %2105 = vmatpush.bf16.msra.mxu0 %v1449
  %2106 = vmatpush.bf16.msra.mxu0 %v1448
  %2107 = vmatpush.bf16.msra.mxu0 %v1447
  %2108 = vmatpush.bf16.msra.mxu0 %v1446
  %2109 = vmatpush.bf16.msra.mxu0 %v1445
  %2110 = vmatpush.bf16.msra.mxu0 %v1444
  %2111 = vmatpush.bf16.msra.mxu0 %v1443
  %2112 = vmatpush.bf16.msra.mxu0 %v1442
  %2113 = vmatmul.bf16.gmra.mxu0 %v1009
  %v2114 = vpop.f32.mrf.mxu0
  %v2115 = vadd.f32 %v2026, %v2114
  %v2116 = vpop.f32.mrf.mxu0
  %v2117 = vadd.f32 %v2028, %v2116
  %2118 = vmatmul.bf16.gmra.mxu0 %v1021
  %v2119 = vpop.f32.mrf.mxu0
  %v2120 = vadd.f32 %v2031, %v2119
  %v2121 = vpop.f32.mrf.mxu0
  %v2122 = vadd.f32 %v2033, %v2121
  %2123 = vmatmul.bf16.gmra.mxu0 %v1033
  %v2124 = vpop.f32.mrf.mxu0
  %v2125 = vadd.f32 %v2036, %v2124
  %v2126 = vpop.f32.mrf.mxu0
  %v2127 = vadd.f32 %v2038, %v2126
  %2128 = vmatmul.bf16.gmra.mxu0 %v1045
  %v2129 = vpop.f32.mrf.mxu0
  %v2130 = vadd.f32 %v2041, %v2129
  %v2131 = vpop.f32.mrf.mxu0
  %v2132 = vadd.f32 %v2043, %v2131
  %2133 = vmatmul.bf16.gmra.mxu0 %v1057
  %v2134 = vpop.f32.mrf.mxu0
  %v2135 = vadd.f32 %v2046, %v2134
  %v2136 = vpop.f32.mrf.mxu0
  %v2137 = vadd.f32 %v2048, %v2136
  %2138 = vmatmul.bf16.gmra.mxu0 %v1069
  %v2139 = vpop.f32.mrf.mxu0
  %v2140 = vadd.f32 %v2051, %v2139
  %v2141 = vpop.f32.mrf.mxu0
  %v2142 = vadd.f32 %v2053, %v2141
  %2143 = vmatmul.bf16.gmra.mxu0 %v1081
  %v2144 = vpop.f32.mrf.mxu0
  %v2145 = vadd.f32 %v2056, %v2144
  %v2146 = vpop.f32.mrf.mxu0
  %v2147 = vadd.f32 %v2058, %v2146
  %2148 = vmatmul.bf16.gmra.mxu0 %v1093
  %v2149 = vpop.f32.mrf.mxu0
  %v2150 = vadd.f32 %v2061, %v2149
  %v2151 = vpop.f32.mrf.mxu0
  %v2152 = vadd.f32 %v2063, %v2151
  %2153 = vmatmul.bf16.gmra.mxu0 %v1105
  %v2154 = vpop.f32.mrf.mxu0
  %v2155 = vadd.f32 %v2066, %v2154
  %v2156 = vpop.f32.mrf.mxu0
  %v2157 = vadd.f32 %v2068, %v2156
  %2158 = vmatmul.bf16.gmra.mxu0 %v1117
  %v2159 = vpop.f32.mrf.mxu0
  %v2160 = vadd.f32 %v2071, %v2159
  %v2161 = vpop.f32.mrf.mxu0
  %v2162 = vadd.f32 %v2073, %v2161
  %2163 = vmatmul.bf16.gmra.mxu0 %v1129
  %v2164 = vpop.f32.mrf.mxu0
  %v2165 = vadd.f32 %v2076, %v2164
  %v2166 = vpop.f32.mrf.mxu0
  %v2167 = vadd.f32 %v2078, %v2166
  %2168 = vmatmul.bf16.gmra.mxu0 %v1141
  %v2169 = vpop.f32.mrf.mxu0
  %v2170 = vadd.f32 %v2081, %v2169
  %v2171 = vpop.f32.mrf.mxu0
  %v2172 = vadd.f32 %v2083, %v2171
  %2173 = vmatmul.bf16.gmra.mxu0 %v1153
  %v2174 = vpop.f32.mrf.mxu0
  %v2175 = vadd.f32 %v2086, %v2174
  %v2176 = vpop.f32.mrf.mxu0
  %v2177 = vadd.f32 %v2088, %v2176
  %2178 = vmatmul.bf16.gmra.mxu0 %v1165
  %v2179 = vpop.f32.mrf.mxu0
  %v2180 = vadd.f32 %v2091, %v2179
  %v2181 = vpop.f32.mrf.mxu0
  %v2182 = vadd.f32 %v2093, %v2181
  %2183 = vmatmul.bf16.gmra.mxu0 %v1177
  %v2184 = vpop.f32.mrf.mxu0
  %v2185 = vadd.f32 %v2096, %v2184
  %v2186 = vpop.f32.mrf.mxu0
  %v2187 = vadd.f32 %v2098, %v2186
  %2188 = vmatmul.bf16.gmra.mxu0 %v1189
  %v2189 = vpop.f32.mrf.mxu0
  %v2190 = vadd.f32 %v2101, %v2189
  %v2191 = vpop.f32.mrf.mxu0
  %v2192 = vadd.f32 %v2103, %v2191
  %2193 = vdwg.mxu0
  %2194 = vmatpush.bf16.msra.mxu0 %v1457
  %2195 = vmatpush.bf16.msra.mxu0 %v1456
  %2196 = vmatpush.bf16.msra.mxu0 %v1455
  %2197 = vmatpush.bf16.msra.mxu0 %v1454
  %2198 = vmatpush.bf16.msra.mxu0 %v1453
  %2199 = vmatpush.bf16.msra.mxu0 %v1452
  %2200 = vmatpush.bf16.msra.mxu0 %v1451
  %2201 = vmatpush.bf16.msra.mxu0 %v1450
  %2202 = vmatmul.bf16.gmra.mxu0 %v1010
  %v2203 = vpop.f32.mrf.mxu0
  %v2204 = vadd.f32 %v2115, %v2203
  %v2205 = vpop.f32.mrf.mxu0
  %v2206 = vadd.f32 %v2117, %v2205
  %2207 = vmatmul.bf16.gmra.mxu0 %v1022
  %v2208 = vpop.f32.mrf.mxu0
  %v2209 = vadd.f32 %v2120, %v2208
  %v2210 = vpop.f32.mrf.mxu0
  %v2211 = vadd.f32 %v2122, %v2210
  %2212 = vmatmul.bf16.gmra.mxu0 %v1034
  %v2213 = vpop.f32.mrf.mxu0
  %v2214 = vadd.f32 %v2125, %v2213
  %v2215 = vpop.f32.mrf.mxu0
  %v2216 = vadd.f32 %v2127, %v2215
  %2217 = vmatmul.bf16.gmra.mxu0 %v1046
  %v2218 = vpop.f32.mrf.mxu0
  %v2219 = vadd.f32 %v2130, %v2218
  %v2220 = vpop.f32.mrf.mxu0
  %v2221 = vadd.f32 %v2132, %v2220
  %2222 = vmatmul.bf16.gmra.mxu0 %v1058
  %v2223 = vpop.f32.mrf.mxu0
  %v2224 = vadd.f32 %v2135, %v2223
  %v2225 = vpop.f32.mrf.mxu0
  %v2226 = vadd.f32 %v2137, %v2225
  %2227 = vmatmul.bf16.gmra.mxu0 %v1070
  %v2228 = vpop.f32.mrf.mxu0
  %v2229 = vadd.f32 %v2140, %v2228
  %v2230 = vpop.f32.mrf.mxu0
  %v2231 = vadd.f32 %v2142, %v2230
  %2232 = vmatmul.bf16.gmra.mxu0 %v1082
  %v2233 = vpop.f32.mrf.mxu0
  %v2234 = vadd.f32 %v2145, %v2233
  %v2235 = vpop.f32.mrf.mxu0
  %v2236 = vadd.f32 %v2147, %v2235
  %2237 = vmatmul.bf16.gmra.mxu0 %v1094
  %v2238 = vpop.f32.mrf.mxu0
  %v2239 = vadd.f32 %v2150, %v2238
  %v2240 = vpop.f32.mrf.mxu0
  %v2241 = vadd.f32 %v2152, %v2240
  %2242 = vmatmul.bf16.gmra.mxu0 %v1106
  %v2243 = vpop.f32.mrf.mxu0
  %v2244 = vadd.f32 %v2155, %v2243
  %v2245 = vpop.f32.mrf.mxu0
  %v2246 = vadd.f32 %v2157, %v2245
  %2247 = vmatmul.bf16.gmra.mxu0 %v1118
  %v2248 = vpop.f32.mrf.mxu0
  %v2249 = vadd.f32 %v2160, %v2248
  %v2250 = vpop.f32.mrf.mxu0
  %v2251 = vadd.f32 %v2162, %v2250
  %2252 = vmatmul.bf16.gmra.mxu0 %v1130
  %v2253 = vpop.f32.mrf.mxu0
  %v2254 = vadd.f32 %v2165, %v2253
  %v2255 = vpop.f32.mrf.mxu0
  %v2256 = vadd.f32 %v2167, %v2255
  %2257 = vmatmul.bf16.gmra.mxu0 %v1142
  %v2258 = vpop.f32.mrf.mxu0
  %v2259 = vadd.f32 %v2170, %v2258
  %v2260 = vpop.f32.mrf.mxu0
  %v2261 = vadd.f32 %v2172, %v2260
  %2262 = vmatmul.bf16.gmra.mxu0 %v1154
  %v2263 = vpop.f32.mrf.mxu0
  %v2264 = vadd.f32 %v2175, %v2263
  %v2265 = vpop.f32.mrf.mxu0
  %v2266 = vadd.f32 %v2177, %v2265
  %2267 = vmatmul.bf16.gmra.mxu0 %v1166
  %v2268 = vpop.f32.mrf.mxu0
  %v2269 = vadd.f32 %v2180, %v2268
  %v2270 = vpop.f32.mrf.mxu0
  %v2271 = vadd.f32 %v2182, %v2270
  %2272 = vmatmul.bf16.gmra.mxu0 %v1178
  %v2273 = vpop.f32.mrf.mxu0
  %v2274 = vadd.f32 %v2185, %v2273
  %v2275 = vpop.f32.mrf.mxu0
  %v2276 = vadd.f32 %v2187, %v2275
  %2277 = vmatmul.bf16.gmra.mxu0 %v1190
  %v2278 = vpop.f32.mrf.mxu0
  %v2279 = vadd.f32 %v2190, %v2278
  %v2280 = vpop.f32.mrf.mxu0
  %v2281 = vadd.f32 %v2192, %v2280
  %2282 = vdwg.mxu0
  %2283 = vmatpush.bf16.msra.mxu0 %v1465
  %2284 = vmatpush.bf16.msra.mxu0 %v1464
  %2285 = vmatpush.bf16.msra.mxu0 %v1463
  %2286 = vmatpush.bf16.msra.mxu0 %v1462
  %2287 = vmatpush.bf16.msra.mxu0 %v1461
  %2288 = vmatpush.bf16.msra.mxu0 %v1460
  %2289 = vmatpush.bf16.msra.mxu0 %v1459
  %2290 = vmatpush.bf16.msra.mxu0 %v1458
  %2291 = vmatmul.bf16.gmra.mxu0 %v1011
  %v2292 = vpop.f32.mrf.mxu0
  %v2293 = vadd.f32 %v2204, %v2292
  %v2294 = vpop.f32.mrf.mxu0
  %v2295 = vadd.f32 %v2206, %v2294
  %2296 = vmatmul.bf16.gmra.mxu0 %v1023
  %v2297 = vpop.f32.mrf.mxu0
  %v2298 = vadd.f32 %v2209, %v2297
  %v2299 = vpop.f32.mrf.mxu0
  %v2300 = vadd.f32 %v2211, %v2299
  %2301 = vmatmul.bf16.gmra.mxu0 %v1035
  %v2302 = vpop.f32.mrf.mxu0
  %v2303 = vadd.f32 %v2214, %v2302
  %v2304 = vpop.f32.mrf.mxu0
  %v2305 = vadd.f32 %v2216, %v2304
  %2306 = vmatmul.bf16.gmra.mxu0 %v1047
  %v2307 = vpop.f32.mrf.mxu0
  %v2308 = vadd.f32 %v2219, %v2307
  %v2309 = vpop.f32.mrf.mxu0
  %v2310 = vadd.f32 %v2221, %v2309
  %2311 = vmatmul.bf16.gmra.mxu0 %v1059
  %v2312 = vpop.f32.mrf.mxu0
  %v2313 = vadd.f32 %v2224, %v2312
  %v2314 = vpop.f32.mrf.mxu0
  %v2315 = vadd.f32 %v2226, %v2314
  %2316 = vmatmul.bf16.gmra.mxu0 %v1071
  %v2317 = vpop.f32.mrf.mxu0
  %v2318 = vadd.f32 %v2229, %v2317
  %v2319 = vpop.f32.mrf.mxu0
  %v2320 = vadd.f32 %v2231, %v2319
  %2321 = vmatmul.bf16.gmra.mxu0 %v1083
  %v2322 = vpop.f32.mrf.mxu0
  %v2323 = vadd.f32 %v2234, %v2322
  %v2324 = vpop.f32.mrf.mxu0
  %v2325 = vadd.f32 %v2236, %v2324
  %2326 = vmatmul.bf16.gmra.mxu0 %v1095
  %v2327 = vpop.f32.mrf.mxu0
  %v2328 = vadd.f32 %v2239, %v2327
  %v2329 = vpop.f32.mrf.mxu0
  %v2330 = vadd.f32 %v2241, %v2329
  %2331 = vmatmul.bf16.gmra.mxu0 %v1107
  %v2332 = vpop.f32.mrf.mxu0
  %v2333 = vadd.f32 %v2244, %v2332
  %v2334 = vpop.f32.mrf.mxu0
  %v2335 = vadd.f32 %v2246, %v2334
  %2336 = vmatmul.bf16.gmra.mxu0 %v1119
  %v2337 = vpop.f32.mrf.mxu0
  %v2338 = vadd.f32 %v2249, %v2337
  %v2339 = vpop.f32.mrf.mxu0
  %v2340 = vadd.f32 %v2251, %v2339
  %2341 = vmatmul.bf16.gmra.mxu0 %v1131
  %v2342 = vpop.f32.mrf.mxu0
  %v2343 = vadd.f32 %v2254, %v2342
  %v2344 = vpop.f32.mrf.mxu0
  %v2345 = vadd.f32 %v2256, %v2344
  %2346 = vmatmul.bf16.gmra.mxu0 %v1143
  %v2347 = vpop.f32.mrf.mxu0
  %v2348 = vadd.f32 %v2259, %v2347
  %v2349 = vpop.f32.mrf.mxu0
  %v2350 = vadd.f32 %v2261, %v2349
  %2351 = vmatmul.bf16.gmra.mxu0 %v1155
  %v2352 = vpop.f32.mrf.mxu0
  %v2353 = vadd.f32 %v2264, %v2352
  %v2354 = vpop.f32.mrf.mxu0
  %v2355 = vadd.f32 %v2266, %v2354
  %2356 = vmatmul.bf16.gmra.mxu0 %v1167
  %v2357 = vpop.f32.mrf.mxu0
  %v2358 = vadd.f32 %v2269, %v2357
  %v2359 = vpop.f32.mrf.mxu0
  %v2360 = vadd.f32 %v2271, %v2359
  %2361 = vmatmul.bf16.gmra.mxu0 %v1179
  %v2362 = vpop.f32.mrf.mxu0
  %v2363 = vadd.f32 %v2274, %v2362
  %v2364 = vpop.f32.mrf.mxu0
  %v2365 = vadd.f32 %v2276, %v2364
  %2366 = vmatmul.bf16.gmra.mxu0 %v1191
  %v2367 = vpop.f32.mrf.mxu0
  %v2368 = vadd.f32 %v2279, %v2367
  %v2369 = vpop.f32.mrf.mxu0
  %v2370 = vadd.f32 %v2281, %v2369
  %2371 = vdwg.mxu0
  %2372 = vmatpush.bf16.msra.mxu0 %v1473
  %2373 = vmatpush.bf16.msra.mxu0 %v1472
  %2374 = vmatpush.bf16.msra.mxu0 %v1471
  %2375 = vmatpush.bf16.msra.mxu0 %v1470
  %2376 = vmatpush.bf16.msra.mxu0 %v1469
  %2377 = vmatpush.bf16.msra.mxu0 %v1468
  %2378 = vmatpush.bf16.msra.mxu0 %v1467
  %2379 = vmatpush.bf16.msra.mxu0 %v1466
  %2380 = vmatmul.bf16.gmra.mxu0 %v1012
  %v2381 = vpop.f32.mrf.mxu0
  %v2382 = vadd.f32 %v2293, %v2381
  %v2383 = vpop.f32.mrf.mxu0
  %v2384 = vadd.f32 %v2295, %v2383
  %2385 = vmatmul.bf16.gmra.mxu0 %v1024
  %v2386 = vpop.f32.mrf.mxu0
  %v2387 = vadd.f32 %v2298, %v2386
  %v2388 = vpop.f32.mrf.mxu0
  %v2389 = vadd.f32 %v2300, %v2388
  %2390 = vmatmul.bf16.gmra.mxu0 %v1036
  %v2391 = vpop.f32.mrf.mxu0
  %v2392 = vadd.f32 %v2303, %v2391
  %v2393 = vpop.f32.mrf.mxu0
  %v2394 = vadd.f32 %v2305, %v2393
  %2395 = vmatmul.bf16.gmra.mxu0 %v1048
  %v2396 = vpop.f32.mrf.mxu0
  %v2397 = vadd.f32 %v2308, %v2396
  %v2398 = vpop.f32.mrf.mxu0
  %v2399 = vadd.f32 %v2310, %v2398
  %2400 = vmatmul.bf16.gmra.mxu0 %v1060
  %v2401 = vpop.f32.mrf.mxu0
  %v2402 = vadd.f32 %v2313, %v2401
  %v2403 = vpop.f32.mrf.mxu0
  %v2404 = vadd.f32 %v2315, %v2403
  %2405 = vmatmul.bf16.gmra.mxu0 %v1072
  %v2406 = vpop.f32.mrf.mxu0
  %v2407 = vadd.f32 %v2318, %v2406
  %v2408 = vpop.f32.mrf.mxu0
  %v2409 = vadd.f32 %v2320, %v2408
  %2410 = vmatmul.bf16.gmra.mxu0 %v1084
  %v2411 = vpop.f32.mrf.mxu0
  %v2412 = vadd.f32 %v2323, %v2411
  %v2413 = vpop.f32.mrf.mxu0
  %v2414 = vadd.f32 %v2325, %v2413
  %2415 = vmatmul.bf16.gmra.mxu0 %v1096
  %v2416 = vpop.f32.mrf.mxu0
  %v2417 = vadd.f32 %v2328, %v2416
  %v2418 = vpop.f32.mrf.mxu0
  %v2419 = vadd.f32 %v2330, %v2418
  %2420 = vmatmul.bf16.gmra.mxu0 %v1108
  %v2421 = vpop.f32.mrf.mxu0
  %v2422 = vadd.f32 %v2333, %v2421
  %v2423 = vpop.f32.mrf.mxu0
  %v2424 = vadd.f32 %v2335, %v2423
  %2425 = vmatmul.bf16.gmra.mxu0 %v1120
  %v2426 = vpop.f32.mrf.mxu0
  %v2427 = vadd.f32 %v2338, %v2426
  %v2428 = vpop.f32.mrf.mxu0
  %v2429 = vadd.f32 %v2340, %v2428
  %2430 = vmatmul.bf16.gmra.mxu0 %v1132
  %v2431 = vpop.f32.mrf.mxu0
  %v2432 = vadd.f32 %v2343, %v2431
  %v2433 = vpop.f32.mrf.mxu0
  %v2434 = vadd.f32 %v2345, %v2433
  %2435 = vmatmul.bf16.gmra.mxu0 %v1144
  %v2436 = vpop.f32.mrf.mxu0
  %v2437 = vadd.f32 %v2348, %v2436
  %v2438 = vpop.f32.mrf.mxu0
  %v2439 = vadd.f32 %v2350, %v2438
  %2440 = vmatmul.bf16.gmra.mxu0 %v1156
  %v2441 = vpop.f32.mrf.mxu0
  %v2442 = vadd.f32 %v2353, %v2441
  %v2443 = vpop.f32.mrf.mxu0
  %v2444 = vadd.f32 %v2355, %v2443
  %2445 = vmatmul.bf16.gmra.mxu0 %v1168
  %v2446 = vpop.f32.mrf.mxu0
  %v2447 = vadd.f32 %v2358, %v2446
  %v2448 = vpop.f32.mrf.mxu0
  %v2449 = vadd.f32 %v2360, %v2448
  %2450 = vmatmul.bf16.gmra.mxu0 %v1180
  %v2451 = vpop.f32.mrf.mxu0
  %v2452 = vadd.f32 %v2363, %v2451
  %v2453 = vpop.f32.mrf.mxu0
  %v2454 = vadd.f32 %v2365, %v2453
  %2455 = vmatmul.bf16.gmra.mxu0 %v1192
  %v2456 = vpop.f32.mrf.mxu0
  %v2457 = vadd.f32 %v2368, %v2456
  %v2458 = vpop.f32.mrf.mxu0
  %v2459 = vadd.f32 %v2370, %v2458
  %2460 = vdwg.mxu0
  %2461 = vmatpush.bf16.msra.mxu0 %v1481
  %2462 = vmatpush.bf16.msra.mxu0 %v1480
  %2463 = vmatpush.bf16.msra.mxu0 %v1479
  %2464 = vmatpush.bf16.msra.mxu0 %v1478
  %2465 = vmatpush.bf16.msra.mxu0 %v1477
  %2466 = vmatpush.bf16.msra.mxu0 %v1476
  %2467 = vmatpush.bf16.msra.mxu0 %v1475
  %2468 = vmatpush.bf16.msra.mxu0 %v1474
  %2469 = vmatmul.bf16.gmra.mxu0 %v1013
  %v2470 = vpop.f32.mrf.mxu0
  %v2471 = vadd.f32 %v2382, %v2470
  %v2472 = vpop.f32.mrf.mxu0
  %v2473 = vadd.f32 %v2384, %v2472
  %2474 = vmatmul.bf16.gmra.mxu0 %v1025
  %v2475 = vpop.f32.mrf.mxu0
  %v2476 = vadd.f32 %v2387, %v2475
  %v2477 = vpop.f32.mrf.mxu0
  %v2478 = vadd.f32 %v2389, %v2477
  %2479 = vmatmul.bf16.gmra.mxu0 %v1037
  %v2480 = vpop.f32.mrf.mxu0
  %v2481 = vadd.f32 %v2392, %v2480
  %v2482 = vpop.f32.mrf.mxu0
  %v2483 = vadd.f32 %v2394, %v2482
  %2484 = vmatmul.bf16.gmra.mxu0 %v1049
  %v2485 = vpop.f32.mrf.mxu0
  %v2486 = vadd.f32 %v2397, %v2485
  %v2487 = vpop.f32.mrf.mxu0
  %v2488 = vadd.f32 %v2399, %v2487
  %2489 = vmatmul.bf16.gmra.mxu0 %v1061
  %v2490 = vpop.f32.mrf.mxu0
  %v2491 = vadd.f32 %v2402, %v2490
  %v2492 = vpop.f32.mrf.mxu0
  %v2493 = vadd.f32 %v2404, %v2492
  %2494 = vmatmul.bf16.gmra.mxu0 %v1073
  %v2495 = vpop.f32.mrf.mxu0
  %v2496 = vadd.f32 %v2407, %v2495
  %v2497 = vpop.f32.mrf.mxu0
  %v2498 = vadd.f32 %v2409, %v2497
  %2499 = vmatmul.bf16.gmra.mxu0 %v1085
  %v2500 = vpop.f32.mrf.mxu0
  %v2501 = vadd.f32 %v2412, %v2500
  %v2502 = vpop.f32.mrf.mxu0
  %v2503 = vadd.f32 %v2414, %v2502
  %2504 = vmatmul.bf16.gmra.mxu0 %v1097
  %v2505 = vpop.f32.mrf.mxu0
  %v2506 = vadd.f32 %v2417, %v2505
  %v2507 = vpop.f32.mrf.mxu0
  %v2508 = vadd.f32 %v2419, %v2507
  %2509 = vmatmul.bf16.gmra.mxu0 %v1109
  %v2510 = vpop.f32.mrf.mxu0
  %v2511 = vadd.f32 %v2422, %v2510
  %v2512 = vpop.f32.mrf.mxu0
  %v2513 = vadd.f32 %v2424, %v2512
  %2514 = vmatmul.bf16.gmra.mxu0 %v1121
  %v2515 = vpop.f32.mrf.mxu0
  %v2516 = vadd.f32 %v2427, %v2515
  %v2517 = vpop.f32.mrf.mxu0
  %v2518 = vadd.f32 %v2429, %v2517
  %2519 = vmatmul.bf16.gmra.mxu0 %v1133
  %v2520 = vpop.f32.mrf.mxu0
  %v2521 = vadd.f32 %v2432, %v2520
  %v2522 = vpop.f32.mrf.mxu0
  %v2523 = vadd.f32 %v2434, %v2522
  %2524 = vmatmul.bf16.gmra.mxu0 %v1145
  %v2525 = vpop.f32.mrf.mxu0
  %v2526 = vadd.f32 %v2437, %v2525
  %v2527 = vpop.f32.mrf.mxu0
  %v2528 = vadd.f32 %v2439, %v2527
  %2529 = vmatmul.bf16.gmra.mxu0 %v1157
  %v2530 = vpop.f32.mrf.mxu0
  %v2531 = vadd.f32 %v2442, %v2530
  %v2532 = vpop.f32.mrf.mxu0
  %v2533 = vadd.f32 %v2444, %v2532
  %2534 = vmatmul.bf16.gmra.mxu0 %v1169
  %v2535 = vpop.f32.mrf.mxu0
  %v2536 = vadd.f32 %v2447, %v2535
  %v2537 = vpop.f32.mrf.mxu0
  %v2538 = vadd.f32 %v2449, %v2537
  %2539 = vmatmul.bf16.gmra.mxu0 %v1181
  %v2540 = vpop.f32.mrf.mxu0
  %v2541 = vadd.f32 %v2452, %v2540
  %v2542 = vpop.f32.mrf.mxu0
  %v2543 = vadd.f32 %v2454, %v2542
  %2544 = vmatmul.bf16.gmra.mxu0 %v1193
  %v2545 = vpop.f32.mrf.mxu0
  %v2546 = vadd.f32 %v2457, %v2545
  %v2547 = vpop.f32.mrf.mxu0
  %v2548 = vadd.f32 %v2459, %v2547
  %2549 = vdwg.mxu0
  %vm2550 = vcmask 400384
  %2551 = vst.msk [vmem:[%s3] sm:$0xff] %vm2550, %v2471
  %2552 = vst.msk [vmem:[%s3 + $0x8] sm:$0xff] %vm2550, %v2473
  %2553 = vst.msk [vmem:[%s3 + $0x10] sm:$0xff] %vm2550, %v2476
  %2554 = vst.msk [vmem:[%s3 + $0x18] sm:$0xff] %vm2550, %v2478
  %2555 = vst.msk [vmem:[%s3 + $0x20] sm:$0xff] %vm2550, %v2481
  %2556 = vst.msk [vmem:[%s3 + $0x28] sm:$0xff] %vm2550, %v2483
  %2557 = vst.msk [vmem:[%s3 + $0x30] sm:$0xff] %vm2550, %v2486
  %2558 = vst.msk [vmem:[%s3 + $0x38] sm:$0xff] %vm2550, %v2488
  %2559 = vst.msk [vmem:[%s3 + $0x40] sm:$0xff] %vm2550, %v2491
  %2560 = vst.msk [vmem:[%s3 + $0x48] sm:$0xff] %vm2550, %v2493
  %2561 = vst.msk [vmem:[%s3 + $0x50] sm:$0xff] %vm2550, %v2496
  %2562 = vst.msk [vmem:[%s3 + $0x58] sm:$0xff] %vm2550, %v2498
  %2563 = vst.msk [vmem:[%s3 + $0x60] sm:$0xff] %vm2550, %v2501
  %2564 = vst.msk [vmem:[%s3 + $0x68] sm:$0xff] %vm2550, %v2503
  %2565 = vst.msk [vmem:[%s3 + $0x70] sm:$0xff] %vm2550, %v2506
  %2566 = vst.msk [vmem:[%s3 + $0x78] sm:$0xff] %vm2550, %v2508
  %2567 = vst.msk [vmem:[%s3 + $0x80] sm:$0xff] %vm2550, %v2511
  %2568 = vst.msk [vmem:[%s3 + $0x88] sm:$0xff] %vm2550, %v2513
  %2569 = vst.msk [vmem:[%s3 + $0x90] sm:$0xff] %vm2550, %v2516
  %2570 = vst.msk [vmem:[%s3 + $0x98] sm:$0xff] %vm2550, %v2518
  %2571 = vst.msk [vmem:[%s3 + $0xa0] sm:$0xff] %vm2550, %v2521
  %2572 = vst.msk [vmem:[%s3 + $0xa8] sm:$0xff] %vm2550, %v2523
  %2573 = vst.msk [vmem:[%s3 + $0xb0] sm:$0xff] %vm2550, %v2526
  %2574 = vst.msk [vmem:[%s3 + $0xb8] sm:$0xff] %vm2550, %v2528
  %2575 = vst.msk [vmem:[%s3 + $0xc0] sm:$0xff] %vm2550, %v2531
  %2576 = vst.msk [vmem:[%s3 + $0xc8] sm:$0xff] %vm2550, %v2533
  %2577 = vst.msk [vmem:[%s3 + $0xd0] sm:$0xff] %vm2550, %v2536
  %2578 = vst.msk [vmem:[%s3 + $0xd8] sm:$0xff] %vm2550, %v2538
  %2579 = vst.msk [vmem:[%s3 + $0xe0] sm:$0xff] %vm2550, %v2541
  %2580 = vst.msk [vmem:[%s3 + $0xe8] sm:$0xff] %vm2550, %v2543
  %2581 = vst.msk [vmem:[%s3 + $0xf0] sm:$0xff] %vm2550, %v2546
  %2582 = vst.msk [vmem:[%s3 + $0xf8] sm:$0xff] %vm2550, %v2548
  // Predicated region
  $region14: #{tpu_custom_call.1} parent=0 // pred_check
    _
  $region15: #{tpu_custom_call.1} parent=0 // pred_check_branch
    %2584 = sbr.rel (0) target = $region17
  $region16: #{tpu_custom_call.1} parent=0 // pred_region
    _
  $region17: #{tpu_custom_call.1} parent=0 // pred_fallthru
    _
  // Predicated region
  $region18: #{tpu_custom_call.1} parent=0 // pred_check
    _
  $region19: #{tpu_custom_call.1} parent=0 // pred_check_branch
    %2586 = sbr.rel (0) target = $region21
  $region20: #{tpu_custom_call.1} parent=0 // pred_region
    _
  $region21: #{tpu_custom_call.1} parent=0 // pred_fallthru
    _

</llo_original>
